<compile_context>
chip_gen: v7x
topology: tpu7x:2x2x1
jax: 0.10.0
libtpu: 0.0.40
codegen_flags: <defaults>
</compile_context>

<pallas_src>
import functools

import jax
import jax.numpy as jnp
from jax.experimental import pallas as pl
from jax.experimental.pallas import tpu as pltpu


# ----------------------------------------------------------------------------
# Fused bottleneck kernel (one image per grid step)
# ----------------------------------------------------------------------------
def _bottleneck_kernel(x_ref, w1_ref, b1_ref, w2_ref, b2_ref, w3_ref, b3_ref,
                       o_ref, buf_ref, *, H, W):
    """Fused bottleneck for one NHWC image flattened to rows.

    x_ref:   (1, H*W, Cin)        bf16  input rows (also the residual)
    w1_ref:  (Cin, Cmid)          bf16  conv1 weight, BN1 scale folded in
    b1_ref:  (1, Cmid)            f32
    w2_ref:  (9*Cmid, Cmid)       bf16  conv2 K-stacked tap weights, BN2 folded
    b2_ref:  (1, Cmid)            f32
    w3_ref:  (Cmid, Cout)         bf16  conv3 weight, BN3 scale folded in
    b3_ref:  (1, Cout)            f32
    o_ref:   (1, H*W, Cout)       bf16
    buf_ref: (2*(W+8) + H*W, Cmid) bf16 scratch (zero-haloed y1)
    """
    HW = H * W
    pad_top = W + 8                     # >= W+1 zero rows; aligned when W%8==0
    cmid = w1_ref.shape[1]

    x = x_ref[0]                                             # (HW, Cin) bf16

    # ---- conv1 (1x1) + BN1 + ReLU -> bf16 y1 ----
    y1 = jnp.dot(x, w1_ref[...], preferred_element_type=jnp.float32)
    y1 = jnp.maximum(y1 + b1_ref[...], 0.0).astype(jnp.bfloat16)

    # ---- stage y1 into the zero-haloed scratch (zero halos only) ----
    n_bot = buf_ref.shape[0] - pad_top - HW
    buf_ref[:pad_top, :] = jnp.zeros((pad_top, cmid), jnp.bfloat16)
    buf_ref[pad_top + HW:, :] = jnp.zeros((n_bot, cmid), jnp.bfloat16)
    buf_ref[pad_top:pad_top + HW, :] = y1

    # Column masks: flattened-row shifts of dw=+-1 wrap across image rows;
    # those positions must see the conv zero-padding instead.
    col = jax.lax.broadcasted_iota(jnp.int32, (HW, 1), 0) % W
    mask_l = col != 0            # dw == -1 tap in-bounds
    mask_r = col != (W - 1)      # dw == +1 tap in-bounds

    # ---- conv2 (3x3, stride=1, pad=1) as ONE fat MXU matmul ----
    # Build the bf16 im2col slab (HW, 9*Cmid); tap order t = (dh+1)*3+(dw+1)
    # matches the K-stacking of w2_ref.
    windows = []
    for dh in (-1, 0, 1):
        for dw in (-1, 0, 1):
            start = pad_top + dh * W + dw                    # static offset
            src = buf_ref[start:start + HW, :]
            if dw == -1:
                src = jnp.where(mask_l, src, jnp.zeros_like(src))
            elif dw == 1:
                src = jnp.where(mask_r, src, jnp.zeros_like(src))
            windows.append(src)
    slab = jnp.concatenate(windows, axis=-1)                 # (HW, 9*Cmid)

    acc = jnp.dot(slab, w2_ref[...], preferred_element_type=jnp.float32)

    # ---- BN2 + ReLU ----
    y2 = jnp.maximum(acc + b2_ref[...], 0.0).astype(jnp.bfloat16)

    # ---- conv3 (1x1) + BN3 + residual + ReLU (f32 epilogue, bf16 store) ----
    y3 = jnp.dot(y2, w3_ref[...], preferred_element_type=jnp.float32)
    y3 = y3 + b3_ref[...] + x.astype(jnp.float32)
    o_ref[0] = jnp.maximum(y3, 0.0).astype(o_ref.dtype)


def _fused_bottleneck_call(x_rows, w1, b1, w2, b2, w3, b3, H, W):
    N, HW, Cin = x_rows.shape
    Cmid = w1.shape[1]
    Cout = w3.shape[1]
    assert HW == H * W

    pad = W + 8
    buf_rows = pad + HW + pad            # top + interior + bottom halo

    kernel = functools.partial(_bottleneck_kernel, H=H, W=W)

    in_specs = [
        pl.BlockSpec((1, HW, Cin), lambda n: (n, 0, 0)),      # x / residual
        pl.BlockSpec((Cin, Cmid), lambda n: (0, 0)),          # w1 (constant)
        pl.BlockSpec((1, Cmid), lambda n: (0, 0)),            # b1
        pl.BlockSpec((9 * Cmid, Cmid), lambda n: (0, 0)),     # w2, K-stacked
        pl.BlockSpec((1, Cmid), lambda n: (0, 0)),            # b2
        pl.BlockSpec((Cmid, Cout), lambda n: (0, 0)),         # w3
        pl.BlockSpec((1, Cout), lambda n: (0, 0)),            # b3
    ]
    out_specs = pl.BlockSpec((1, HW, Cout), lambda n: (n, 0, 0))

    return pl.pallas_call(
        kernel,
        out_shape=jax.ShapeDtypeStruct((N, HW, Cout), jnp.bfloat16),
        grid_spec=pltpu.PrefetchScalarGridSpec(
            num_scalar_prefetch=0,
            grid=(N,),                   # batch axis, both TCs get work
            in_specs=in_specs,
            out_specs=out_specs,
            scratch_shapes=[pltpu.VMEM((buf_rows, Cmid), jnp.bfloat16)],
        ),
        compiler_params=pltpu.CompilerParams(
            dimension_semantics=("parallel",),
            vmem_limit_bytes=48 * 1024 * 1024,   # headroom on v7x's 64 MiB
        ),
    )(x_rows, w1, b1, w2, b2, w3, b3)


# ----------------------------------------------------------------------------
# Wrapper: layout conversion + BN folding (trace-time constant folding)
# ----------------------------------------------------------------------------
def _fold_bn(gamma, beta, mean, var, eps=1e-5):
    scale = gamma / jnp.sqrt(var + eps)
    bias = beta - mean * scale
    return scale, bias


def bottleneck_forward(x_nchw, params):
    """Bottleneck forward (inference): conv1(1x1)-bn-relu, conv2(3x3,p=1)-bn-relu,
    conv3(1x1)-bn, + identity, relu.  stride=1, downsample=None.
    Returns bf16 NCHW (downstream blocks consume bf16)."""
    x = jnp.transpose(x_nchw, (0, 2, 3, 1))                  # NCHW -> NHWC once
    N, H, W, Cin = x.shape

    w1 = params["w1_oihw"]            # (Cmid, Cin, 1, 1)
    w2 = params["w2_oihw"]            # (Cmid, Cmid, 3, 3)
    w3 = params["w3_oihw"]            # (Cout, Cmid, 1, 1)
    Cmid = w1.shape[0]
    Cout = w3.shape[0]
    assert Cout == Cin, "identity path requires in_channels == out_channels*expansion"

    s1, b1 = _fold_bn(*params["bn1"])
    s2, b2 = _fold_bn(*params["bn2"])
    s3, b3 = _fold_bn(*params["bn3"])

    # Fold BN scales into the weights; cast matmul operands to bf16.
    w1_mat = (w1.reshape(Cmid, Cin).T * s1[None, :]).astype(jnp.bfloat16)
    w3_mat = (w3.reshape(Cout, Cmid).T * s3[None, :]).astype(jnp.bfloat16)
    # conv2: K-stacked per-tap matrices, tap index t = kh*3 + kw (matches the
    # in-kernel im2col concat order); BN2 scale folded into cout.
    w2_taps = jnp.transpose(w2, (2, 3, 1, 0)).reshape(9, Cmid, Cmid) * s2[None, None, :]
    w2_flat = w2_taps.reshape(9 * Cmid, Cmid).astype(jnp.bfloat16)

    x_rows = x.reshape(N, H * W, Cin).astype(jnp.bfloat16)

    out_rows = _fused_bottleneck_call(
        x_rows,
        w1_mat, b1.reshape(1, Cmid).astype(jnp.float32),
        w2_flat, b2.reshape(1, Cmid).astype(jnp.float32),
        w3_mat, b3.reshape(1, Cout).astype(jnp.float32),
        H, W)

    return jnp.transpose(out_rows.reshape(N, H, W, Cout), (0, 3, 1, 2))


# ----------------------------------------------------------------------------
# Pure-JAX reference (lax.conv, f32) for verification
# ----------------------------------------------------------------------------
def bottleneck_reference(x_nchw, params):
    def conv(x, w, stride=1, padv=0):
        return jax.lax.conv_general_dilated(
            x, w, (stride, stride), [(padv, padv), (padv, padv)],
            dimension_numbers=("NCHW", "OIHW", "NCHW"))

    def bn(y, g_b_m_v):
        s, b = _fold_bn(*g_b_m_v)
        return y * s[None, :, None, None] + b[None, :, None, None]

    out = jax.nn.relu(bn(conv(x_nchw, params["w1_oihw"]), params["bn1"]))
    out = jax.nn.relu(bn(conv(out, params["w2_oihw"], 1, 1), params["bn2"]))
    out = bn(conv(out, params["w3_oihw"]), params["bn3"]) + x_nchw
    return jax.nn.relu(out)


# ----------------------------------------------------------------------------
# Deterministic parameter construction (shapes from Bottleneck.__init__)
# ----------------------------------------------------------------------------
def make_params(key, in_channels, out_channels):
    expansion = 4
    ks = jax.random.split(key, 6)

    def conv_w(k, shape):
        fan_in = shape[1] * shape[2] * shape[3]
        return (jax.random.normal(k, shape) / jnp.sqrt(fan_in)).astype(jnp.float32)

    def bn_params(k, c):
        k1, k2, k3, k4 = jax.random.split(k, 4)
        gamma = jax.random.uniform(k1, (c,), minval=0.8, maxval=1.2).astype(jnp.float32)
        beta = (0.1 * jax.random.normal(k2, (c,))).astype(jnp.float32)
        mean = (0.1 * jax.random.normal(k3, (c,))).astype(jnp.float32)
        var = jax.random.uniform(k4, (c,), minval=0.8, maxval=1.2).astype(jnp.float32)
        return (gamma, beta, mean, var)

    return {
        "w1_oihw": conv_w(ks[0], (out_channels, in_channels, 1, 1)),
        "w2_oihw": conv_w(ks[1], (out_channels, out_channels, 3, 3)),
        "w3_oihw": conv_w(ks[2], (out_channels * expansion, out_channels, 1, 1)),
        "bn1": bn_params(ks[3], out_channels),
        "bn2": bn_params(ks[4], out_channels),
        "bn3": bn_params(ks[5], out_channels * expansion),
    }


if __name__ == "__main__":
    key = jax.random.PRNGKey(0)
    kx, kp = jax.random.split(key)

    # Inner ResNet bottleneck (conv3_x-sized): in_channels == out_channels*4
    # so the identity residual matches (stride=1, downsample=None).  Cmid=128
    # keeps every matmul dimension and every im2col tap lane-dense; spatial
    # and batch stay small.
    N, H, W = 2, 8, 8
    out_channels = 128
    Cin = out_channels * 4            # 512

    x = jax.random.normal(kx, (N, Cin, H, W), dtype=jnp.float32)
    params = make_params(kp, Cin, out_channels)

    out = jax.block_until_ready(bottleneck_forward(x, params))
    ref = jax.block_until_ready(bottleneck_reference(x, params))

    assert out.shape == (N, Cin, H, W), out.shape
    out_f32 = out.astype(jnp.float32)
    max_err = float(jnp.max(jnp.abs(out_f32 - ref)))
    assert jnp.allclose(out_f32, ref, atol=5e-2, rtol=5e-2), max_err
    print("KERNEL_OK")
</pallas_src>

<mosaic_0001>
module attributes {stable_mosaic.version = 11 : i64} {
  func.func @_bottleneck_kernel(%arg0: i32, %arg1: memref<1x64x512xbf16, #tpu.memory_space<vmem>>, %arg2: memref<512x128xbf16, #tpu.memory_space<vmem>>, %arg3: memref<1x128xf32, #tpu.memory_space<vmem>>, %arg4: memref<1152x128xbf16, #tpu.memory_space<vmem>>, %arg5: memref<1x128xf32, #tpu.memory_space<vmem>>, %arg6: memref<128x512xbf16, #tpu.memory_space<vmem>>, %arg7: memref<1x512xf32, #tpu.memory_space<vmem>>, %arg8: memref<1x64x512xbf16, #tpu.memory_space<vmem>>, %arg9: memref<96x128xbf16, #tpu.memory_space<vmem>>) attributes {dimension_semantics = [#tpu.dimension_semantics<parallel>], iteration_bounds = array<i64: 2>, scalar_prefetch = 0 : i64, scratch_operands = 1 : i64, tpu.core_type = #tpu.core_type<tc>, window_params = [{transform_indices = @transform_0, window_bounds = array<i64: 1, 64, 512>}, {pipeline_mode = #tpu.pipeline_mode<synchronous>, transform_indices = @transform_1, window_bounds = array<i64: 512, 128>}, {pipeline_mode = #tpu.pipeline_mode<synchronous>, transform_indices = @transform_2, window_bounds = array<i64: 1, 128>}, {pipeline_mode = #tpu.pipeline_mode<synchronous>, transform_indices = @transform_3, window_bounds = array<i64: 1152, 128>}, {pipeline_mode = #tpu.pipeline_mode<synchronous>, transform_indices = @transform_4, window_bounds = array<i64: 1, 128>}, {pipeline_mode = #tpu.pipeline_mode<synchronous>, transform_indices = @transform_5, window_bounds = array<i64: 128, 512>}, {pipeline_mode = #tpu.pipeline_mode<synchronous>, transform_indices = @transform_6, window_bounds = array<i64: 1, 512>}, {transform_indices = @transform_7, window_bounds = array<i64: 1, 64, 512>}]} {
    %c0 = arith.constant 0 : index
    %c0_0 = arith.constant 0 : index
    %c0_1 = arith.constant 0 : index
    %0 = vector.load %arg1[%c0, %c0_0, %c0_1] : memref<1x64x512xbf16, #tpu.memory_space<vmem>>, vector<1x64x512xbf16>
    %1 = vector.shape_cast %0 : vector<1x64x512xbf16> to vector<64x512xbf16>
    %c0_2 = arith.constant 0 : index
    %c0_3 = arith.constant 0 : index
    %2 = vector.load %arg2[%c0_2, %c0_3] : memref<512x128xbf16, #tpu.memory_space<vmem>>, vector<512x128xbf16>
    %cst = arith.constant dense<0.000000e+00> : vector<64x128xf32>
    %3 = tpu.matmul %1, %2, %cst {dimension_numbers = #tpu.dot_dimension_numbers<[1], [0], [0], [1], [0, 0, 1, 1], [], []>} : vector<64x512xbf16>, vector<512x128xbf16>, vector<64x128xf32> -> vector<64x128xf32>
    %c0_4 = arith.constant 0 : index
    %c0_5 = arith.constant 0 : index
    %4 = vector.load %arg3[%c0_4, %c0_5] : memref<1x128xf32, #tpu.memory_space<vmem>>, vector<1x128xf32>
    %5 = vector.broadcast %4 : vector<1x128xf32> to vector<64x128xf32>
    %6 = arith.addf %3, %5 : vector<64x128xf32>
    %cst_6 = arith.constant 0.000000e+00 : f32
    %7 = vector.broadcast %cst_6 : f32 to vector<64x128xf32>
    %8 = arith.maximumf %6, %7 : vector<64x128xf32>
    %9 = arith.truncf %8 : vector<64x128xf32> to vector<64x128xbf16>
    %cst_7 = arith.constant 0.000000e+00 : bf16
    %10 = vector.broadcast %cst_7 : bf16 to vector<16x128xbf16>
    %c0_8 = arith.constant 0 : index
    %c0_9 = arith.constant 0 : index
    %11 = vector.load %arg9[%c0_8, %c0_9] : memref<96x128xbf16, #tpu.memory_space<vmem>>, vector<16x128xbf16>
    tpu.vector_store %arg9[%c0_8, %c0_9], %10 {strides = array<i32>} : memref<96x128xbf16, #tpu.memory_space<vmem>>, vector<16x128xbf16>,
    %cst_10 = arith.constant 0.000000e+00 : bf16
    %12 = vector.broadcast %cst_10 : bf16 to vector<16x128xbf16>
    %c80 = arith.constant 80 : index
    %c0_11 = arith.constant 0 : index
    %13 = vector.load %arg9[%c80, %c0_11] : memref<96x128xbf16, #tpu.memory_space<vmem>>, vector<16x128xbf16>
    tpu.vector_store %arg9[%c80, %c0_11], %12 {strides = array<i32>} : memref<96x128xbf16, #tpu.memory_space<vmem>>, vector<16x128xbf16>,
    %c16 = arith.constant 16 : index
    %c0_12 = arith.constant 0 : index
    %14 = vector.load %arg9[%c16, %c0_12] : memref<96x128xbf16, #tpu.memory_space<vmem>>, vector<64x128xbf16>
    tpu.vector_store %arg9[%c16, %c0_12], %9 {strides = array<i32>} : memref<96x128xbf16, #tpu.memory_space<vmem>>, vector<64x128xbf16>,
    %15 = tpu.iota {dimensions = array<i32: 0>} : vector<64x1xi32>
    %c8_i32 = arith.constant 8 : i32
    %c0_i32 = arith.constant 0 : i32
    %16 = arith.cmpi eq, %c8_i32, %c0_i32 : i32
    %c1_i32 = arith.constant 1 : i32
    %17 = arith.select %16, %c1_i32, %c8_i32 : i32
    %18 = vector.broadcast %17 : i32 to vector<64x1xi32>
    %19 = arith.remsi %15, %18 : vector<64x1xi32>
    %c0_i32_13 = arith.constant 0 : i32
    %20 = vector.broadcast %c0_i32_13 : i32 to vector<64x1xi32>
    %21 = arith.cmpi ne, %19, %20 : vector<64x1xi32>
    %c0_i32_14 = arith.constant 0 : i32
    %22 = vector.broadcast %c0_i32_14 : i32 to vector<64x1xi32>
    %23 = arith.cmpi slt, %19, %22 : vector<64x1xi32>
    %c0_i32_15 = arith.constant 0 : i32
    %24 = arith.cmpi slt, %17, %c0_i32_15 : i32
    %25 = vector.broadcast %24 : i1 to vector<64x1xi1>
    %26 = vector.broadcast %25 : vector<64x1xi1> to vector<64x1xi1>
    %27 = arith.xori %23, %26 : vector<64x1xi1>
    %28 = arith.andi %27, %21 : vector<64x1xi1>
    %29 = vector.broadcast %17 : i32 to vector<64x1xi32>
    %30 = arith.addi %19, %29 : vector<64x1xi32>
    %31 = arith.select %28, %30, %19 : vector<64x1xi1>, vector<64x1xi32>
    %c0_i32_16 = arith.constant 0 : i32
    %32 = vector.broadcast %c0_i32_16 : i32 to vector<64x1xi32>
    %33 = arith.cmpi ne, %31, %32 : vector<64x1xi32>
    %c7_i32 = arith.constant 7 : i32
    %34 = vector.broadcast %c7_i32 : i32 to vector<64x1xi32>
    %35 = arith.cmpi ne, %31, %34 : vector<64x1xi32>
    %c7 = arith.constant 7 : index
    %c0_17 = arith.constant 0 : index
    %36 = vector.load %arg9[%c7, %c0_17] : memref<96x128xbf16, #tpu.memory_space<vmem>>, vector<64x128xbf16>
    %cst_18 = arith.constant 0.000000e+00 : bf16
    %37 = vector.broadcast %cst_18 : bf16 to vector<64x128xbf16>
    %38 = vector.shape_cast %33 : vector<64x1xi1> to vector<64x1xi1>
    %39 = vector.broadcast %38 : vector<64x1xi1> to vector<64x128xi1>
    %40 = arith.select %39, %36, %37 : vector<64x128xi1>, vector<64x128xbf16>
    %c8 = arith.constant 8 : index
    %c0_19 = arith.constant 0 : index
    %41 = vector.load %arg9[%c8, %c0_19] : memref<96x128xbf16, #tpu.memory_space<vmem>>, vector<64x128xbf16>
    %c9 = arith.constant 9 : index
    %c0_20 = arith.constant 0 : index
    %42 = vector.load %arg9[%c9, %c0_20] : memref<96x128xbf16, #tpu.memory_space<vmem>>, vector<64x128xbf16>
    %cst_21 = arith.constant 0.000000e+00 : bf16
    %43 = vector.broadcast %cst_21 : bf16 to vector<64x128xbf16>
    %44 = vector.shape_cast %35 : vector<64x1xi1> to vector<64x1xi1>
    %45 = vector.broadcast %44 : vector<64x1xi1> to vector<64x128xi1>
    %46 = arith.select %45, %42, %43 : vector<64x128xi1>, vector<64x128xbf16>
    %c15 = arith.constant 15 : index
    %c0_22 = arith.constant 0 : index
    %47 = vector.load %arg9[%c15, %c0_22] : memref<96x128xbf16, #tpu.memory_space<vmem>>, vector<64x128xbf16>
    %cst_23 = arith.constant 0.000000e+00 : bf16
    %48 = vector.broadcast %cst_23 : bf16 to vector<64x128xbf16>
    %49 = vector.shape_cast %33 : vector<64x1xi1> to vector<64x1xi1>
    %50 = vector.broadcast %49 : vector<64x1xi1> to vector<64x128xi1>
    %51 = arith.select %50, %47, %48 : vector<64x128xi1>, vector<64x128xbf16>
    %c16_24 = arith.constant 16 : index
    %c0_25 = arith.constant 0 : index
    %52 = vector.load %arg9[%c16_24, %c0_25] : memref<96x128xbf16, #tpu.memory_space<vmem>>, vector<64x128xbf16>
    %c17 = arith.constant 17 : index
    %c0_26 = arith.constant 0 : index
    %53 = vector.load %arg9[%c17, %c0_26] : memref<96x128xbf16, #tpu.memory_space<vmem>>, vector<64x128xbf16>
    %cst_27 = arith.constant 0.000000e+00 : bf16
    %54 = vector.broadcast %cst_27 : bf16 to vector<64x128xbf16>
    %55 = vector.shape_cast %35 : vector<64x1xi1> to vector<64x1xi1>
    %56 = vector.broadcast %55 : vector<64x1xi1> to vector<64x128xi1>
    %57 = arith.select %56, %53, %54 : vector<64x128xi1>, vector<64x128xbf16>
    %c23 = arith.constant 23 : index
    %c0_28 = arith.constant 0 : index
    %58 = vector.load %arg9[%c23, %c0_28] : memref<96x128xbf16, #tpu.memory_space<vmem>>, vector<64x128xbf16>
    %cst_29 = arith.constant 0.000000e+00 : bf16
    %59 = vector.broadcast %cst_29 : bf16 to vector<64x128xbf16>
    %60 = vector.shape_cast %33 : vector<64x1xi1> to vector<64x1xi1>
    %61 = vector.broadcast %60 : vector<64x1xi1> to vector<64x128xi1>
    %62 = arith.select %61, %58, %59 : vector<64x128xi1>, vector<64x128xbf16>
    %c24 = arith.constant 24 : index
    %c0_30 = arith.constant 0 : index
    %63 = vector.load %arg9[%c24, %c0_30] : memref<96x128xbf16, #tpu.memory_space<vmem>>, vector<64x128xbf16>
    %c25 = arith.constant 25 : index
    %c0_31 = arith.constant 0 : index
    %64 = vector.load %arg9[%c25, %c0_31] : memref<96x128xbf16, #tpu.memory_space<vmem>>, vector<64x128xbf16>
    %cst_32 = arith.constant 0.000000e+00 : bf16
    %65 = vector.broadcast %cst_32 : bf16 to vector<64x128xbf16>
    %66 = vector.shape_cast %35 : vector<64x1xi1> to vector<64x1xi1>
    %67 = vector.broadcast %66 : vector<64x1xi1> to vector<64x128xi1>
    %68 = arith.select %67, %64, %65 : vector<64x128xi1>, vector<64x128xbf16>
    %69 = tpu.concatenate %40, %41, %46, %51, %52, %57, %62, %63, %68 in 1 : vector<64x128xbf16>, vector<64x128xbf16>, vector<64x128xbf16>, vector<64x128xbf16>, vector<64x128xbf16>, vector<64x128xbf16>, vector<64x128xbf16>, vector<64x128xbf16>, vector<64x128xbf16> -> vector<64x1152xbf16>
    %c0_33 = arith.constant 0 : index
    %c0_34 = arith.constant 0 : index
    %70 = vector.load %arg4[%c0_33, %c0_34] : memref<1152x128xbf16, #tpu.memory_space<vmem>>, vector<1152x128xbf16>
    %cst_35 = arith.constant dense<0.000000e+00> : vector<64x128xf32>
    %71 = tpu.matmul %69, %70, %cst_35 {dimension_numbers = #tpu.dot_dimension_numbers<[1], [0], [0], [1], [0, 0, 1, 1], [], []>} : vector<64x1152xbf16>, vector<1152x128xbf16>, vector<64x128xf32> -> vector<64x128xf32>
    %c0_36 = arith.constant 0 : index
    %c0_37 = arith.constant 0 : index
    %72 = vector.load %arg5[%c0_36, %c0_37] : memref<1x128xf32, #tpu.memory_space<vmem>>, vector<1x128xf32>
    %73 = vector.broadcast %72 : vector<1x128xf32> to vector<64x128xf32>
    %74 = arith.addf %71, %73 : vector<64x128xf32>
    %cst_38 = arith.constant 0.000000e+00 : f32
    %75 = vector.broadcast %cst_38 : f32 to vector<64x128xf32>
    %76 = arith.maximumf %74, %75 : vector<64x128xf32>
    %77 = arith.truncf %76 : vector<64x128xf32> to vector<64x128xbf16>
    %c0_39 = arith.constant 0 : index
    %c0_40 = arith.constant 0 : index
    %78 = vector.load %arg6[%c0_39, %c0_40] : memref<128x512xbf16, #tpu.memory_space<vmem>>, vector<128x512xbf16>
    %cst_41 = arith.constant dense<0.000000e+00> : vector<64x512xf32>
    %79 = tpu.matmul %77, %78, %cst_41 {dimension_numbers = #tpu.dot_dimension_numbers<[1], [0], [0], [1], [0, 0, 1, 1], [], []>} : vector<64x128xbf16>, vector<128x512xbf16>, vector<64x512xf32> -> vector<64x512xf32>
    %c0_42 = arith.constant 0 : index
    %c0_43 = arith.constant 0 : index
    %80 = vector.load %arg7[%c0_42, %c0_43] : memref<1x512xf32, #tpu.memory_space<vmem>>, vector<1x512xf32>
    %81 = vector.broadcast %80 : vector<1x512xf32> to vector<64x512xf32>
    %82 = arith.addf %79, %81 : vector<64x512xf32>
    %83 = arith.extf %1 : vector<64x512xbf16> to vector<64x512xf32>
    %84 = arith.addf %82, %83 : vector<64x512xf32>
    %cst_44 = arith.constant 0.000000e+00 : f32
    %85 = vector.broadcast %cst_44 : f32 to vector<64x512xf32>
    %86 = arith.maximumf %84, %85 : vector<64x512xf32>
    %87 = arith.truncf %86 : vector<64x512xf32> to vector<64x512xbf16>
    %c0_45 = arith.constant 0 : index
    %c0_46 = arith.constant 0 : index
    %c0_47 = arith.constant 0 : index
    %88 = vector.load %arg8[%c0_45, %c0_46, %c0_47] : memref<1x64x512xbf16, #tpu.memory_space<vmem>>, vector<1x64x512xbf16>
    %89 = vector.shape_cast %88 : vector<1x64x512xbf16> to vector<64x512xbf16>
    %90 = vector.shape_cast %87 : vector<64x512xbf16> to vector<1x64x512xbf16>
    tpu.vector_store %arg8[%c0_45, %c0_46, %c0_47], %90 {strides = array<i32>} : memref<1x64x512xbf16, #tpu.memory_space<vmem>>, vector<1x64x512xbf16>,
    return
  }
  func.func @transform_0(%arg0: i32) -> (i32, i32, i32) {
    %c0_i32 = arith.constant 0 : i32
    %c0_i32_0 = arith.constant 0 : i32
    %c0_i32_1 = arith.constant 0 : i32
    return %arg0, %c0_i32, %c0_i32_0 : i32, i32, i32
  }
  func.func @transform_1(%arg0: i32) -> (i32, i32) {
    %c0_i32 = arith.constant 0 : i32
    %c0_i32_0 = arith.constant 0 : i32
    %c0_i32_1 = arith.constant 0 : i32
    return %c0_i32, %c0_i32_0 : i32, i32
  }
  func.func @transform_2(%arg0: i32) -> (i32, i32) {
    %c0_i32 = arith.constant 0 : i32
    %c0_i32_0 = arith.constant 0 : i32
    %c0_i32_1 = arith.constant 0 : i32
    return %c0_i32, %c0_i32_0 : i32, i32
  }
  func.func @transform_3(%arg0: i32) -> (i32, i32) {
    %c0_i32 = arith.constant 0 : i32
    %c0_i32_0 = arith.constant 0 : i32
    %c0_i32_1 = arith.constant 0 : i32
    return %c0_i32, %c0_i32_0 : i32, i32
  }
  func.func @transform_4(%arg0: i32) -> (i32, i32) {
    %c0_i32 = arith.constant 0 : i32
    %c0_i32_0 = arith.constant 0 : i32
    %c0_i32_1 = arith.constant 0 : i32
    return %c0_i32, %c0_i32_0 : i32, i32
  }
  func.func @transform_5(%arg0: i32) -> (i32, i32) {
    %c0_i32 = arith.constant 0 : i32
    %c0_i32_0 = arith.constant 0 : i32
    %c0_i32_1 = arith.constant 0 : i32
    return %c0_i32, %c0_i32_0 : i32, i32
  }
  func.func @transform_6(%arg0: i32) -> (i32, i32) {
    %c0_i32 = arith.constant 0 : i32
    %c0_i32_0 = arith.constant 0 : i32
    %c0_i32_1 = arith.constant 0 : i32
    return %c0_i32, %c0_i32_0 : i32, i32
  }
  func.func @transform_7(%arg0: i32) -> (i32, i32, i32) {
    %c0_i32 = arith.constant 0 : i32
    %c0_i32_0 = arith.constant 0 : i32
    %c0_i32_1 = arith.constant 0 : i32
    return %arg0, %c0_i32, %c0_i32_0 : i32, i32, i32
  }
}

</mosaic_0001>

<llo_original>
// kernel: tpu_custom_call.1
$region0: #{tpu_custom_call.1}
  #allocation0 [shape = 'u32[]', space=smem, size = 0x4, offset = 0x4, fixed_abs, tag = 'smem constant byte address 0x4 - core index']
  #allocation1 [shape = 'u32[144,128]{1,0:T(1,128)}', space=vmem, size = 0x12000, scoped, tag = 'internal scratch']
  #allocation2 [shape = 'bf16[96,128]{1,0:T(16,128)(2,1)}', space=vmem, size = 0x6000, scoped, tag = 'scratch operand']
  %s0 = inlined_call_operand.hbm [shape: bf16[2,64,512], index: 0, kind: input, shape index: {}]
  %s1 = inlined_call_operand.hbm [shape: bf16[512,128], index: 1, kind: input, shape index: {}]
  %s2 = inlined_call_operand.vmem [shape: f32[1,128], index: 2, kind: input, shape index: {}]
  %s3 = inlined_call_operand.hbm [shape: bf16[1152,128], index: 3, kind: input, shape index: {}]
  %s4 = inlined_call_operand.vmem [shape: f32[1,128], index: 4, kind: input, shape index: {}]
  %s5 = inlined_call_operand.hbm [shape: bf16[128,512], index: 5, kind: input, shape index: {}]
  %s6 = inlined_call_operand.vmem [shape: f32[1,512], index: 6, kind: input, shape index: {}]
  %s7 = inlined_call_operand.hbm [shape: bf16[2,64,512], index: 7, kind: output, shape index: {}]
  %s8 = sld [smem:[#allocation0]]
  $region77: #{tpu_custom_call.1} parent=0
    _
  %s10 = ssub.s32 1, %s8
  %s11 = scalar_select 0, %s10, %s8
  $region1: #{tpu_custom_call.1} parent=0
    #allocation3 [shape = 'u8[131072]{0}', space=vmem, size = 0x20000, scoped, tag = 'input window, operand 0']
    #allocation4 [shape = 's32[2]{0}', space=sflag, size = 0x8, scoped, tag = 'scoped memory for tpu_custom_call.1']
    #allocation5 [shape = 's32[2]{0}', space=sflag, size = 0x8, scoped, tag = 'scoped memory for tpu_custom_call.1']
    #allocation6 [shape = 'u8[131072]{0}', space=vmem, size = 0x20000, scoped, tag = 'input window, operand 1, single buffered']
    #allocation7 [shape = 's32[1]{0}', space=sflag, size = 0x4, scoped, tag = 'scoped memory for tpu_custom_call.1']
    #allocation8 [shape = 'u8[294912]{0}', space=vmem, size = 0x48000, scoped, tag = 'input window, operand 3, single buffered']
    #allocation9 [shape = 'u8[131072]{0}', space=vmem, size = 0x20000, scoped, tag = 'input window, operand 5, single buffered']
    #allocation10 [shape = 's32[1]{0}', space=sflag, size = 0x4, scoped, tag = 'scoped memory for tpu_custom_call.1']
    #allocation11 [shape = 'u8[131072]{0}', space=vmem, size = 0x20000, scoped, tag = 'output window, operand 0']
    %12 = vsyncpa [#allocation4], 0
    %s13 = scalar_lea.sflag [#allocation4], 1
    %14 = vsyncpa %s13, 0
    %15 = vsyncpa [#allocation7], 0
    %16 = vsyncpa [#allocation10], 0
    %17 = vsyncpa [#allocation5], 0
    %s18 = scalar_lea.sflag [#allocation5], 1
    %19 = vsyncpa %s18, 0
    loop: start=0, step=1, limit=4
    $region2: #{tpu_custom_call.1} parent=1 // loop_pre_header
      _
    $region3: #{tpu_custom_call.1} parent=1 // loop_header
      %s21 = sphi 0, %s25
      %p22 = scmp.ge.s32.totalorder %s21, 4
      %s31 = sphi 0, %s33
      %s34 = sphi 0, %s31
      %s35 = sphi 0, %s34
      %s51 = sphi 0, %s35
      %s55 = sphi 0, %s55
      %s57 = sphi 0, %s55
      %s58 = sphi 0, %s57
      %s72 = sphi 0, %s58
      %s76 = sphi 0, %s76
      %s78 = sphi 0, %s76
      %s79 = sphi 0, %s78
      %s93 = sphi 0, %s79
      %s97 = sphi 0, %s97
      %s99 = sphi 0, %s97
      %s100 = sphi 0, %s99
      %s114 = sphi 0, %s100
      %s118 = sphi 0, %s118
      %s120 = sphi 0, %s118
      %s121 = sphi 0, %s120
      %s135 = sphi 0, %s121
      %s139 = sphi 0, %s139
      %s141 = sphi 0, %s139
      %s142 = sphi 0, %s141
      %s156 = sphi 0, %s142
      %s160 = sphi 0, %s160
      %s162 = sphi 0, %s160
      %s163 = sphi 0, %s162
      %s177 = sphi 0, %s163
      %s183 = sphi 0, %s185
      %s186 = sphi 0, %s183
      %s187 = sphi 0, %s186
      %s203 = sphi 0, %s187
    $region4: #{tpu_custom_call.1} parent=1 // loop_header_branch
      %24 = sbr.rel (%p22) target = $region8
    $region5: #{tpu_custom_call.1} parent=1 // loop_body
      %s26 = ssub.s32 %s21, 1
      %s27 = ssub.s32 %s21, 2
      %s28 = sadd.s32 %s21, 1
      %s29 = ssub.s32 %s21, %s28
      %p30 = scmp.eq.s32.totalorder %s29, 0
      %s32 = sadd.s32 %s31, 1
      %s33 = scalar_select %p30, %s31, %s32
      %p36 = pneg %p30
      %p37 = scmp.eq.s32.totalorder %s21, 1
      %p38 = por %p36, %p37
      %p39 = scmp.ne.s32.totalorder %s31, %s34
      %p40 = scmp.eq.s32.totalorder %s21, 0
      %p41 = por %p39, %p40
      %p42 = scmp.ne.s32.totalorder %s31, %s34
      %p43 = scmp.eq.s32.totalorder %s26, 1
      %p44 = por %p42, %p43
      %p45 = scmp.ne.s32.totalorder %s34, %s35
      %p46 = scmp.eq.s32.totalorder %s26, 0
      %p47 = por %p45, %p46
      %p48 = scmp.ne.s32.totalorder %s34, %s35
      %p49 = scmp.eq.s32.totalorder %s27, 1
      %p50 = por %p48, %p49
      %p52 = scmp.ne.s32.totalorder %s35, %s51
      %p53 = scmp.eq.s32.totalorder %s27, 0
      %p54 = por %p52, %p53
      %s56 = sadd.s32 %s55, 1
      %p59 = scmp.eq.s32.totalorder %s21, 1
      %p60 = scmp.ne.s32.totalorder %s55, %s57
      %p61 = scmp.eq.s32.totalorder %s21, 0
      %p62 = por %p60, %p61
      %p63 = scmp.ne.s32.totalorder %s55, %s57
      %p64 = scmp.eq.s32.totalorder %s26, 1
      %p65 = por %p63, %p64
      %p66 = scmp.ne.s32.totalorder %s57, %s58
      %p67 = scmp.eq.s32.totalorder %s26, 0
      %p68 = por %p66, %p67
      %p69 = scmp.ne.s32.totalorder %s57, %s58
      %p70 = scmp.eq.s32.totalorder %s27, 1
      %p71 = por %p69, %p70
      %p73 = scmp.ne.s32.totalorder %s58, %s72
      %p74 = scmp.eq.s32.totalorder %s27, 0
      %p75 = por %p73, %p74
      %s77 = sadd.s32 %s76, 1
      %p80 = scmp.eq.s32.totalorder %s21, 1
      %p81 = scmp.ne.s32.totalorder %s76, %s78
      %p82 = scmp.eq.s32.totalorder %s21, 0
      %p83 = por %p81, %p82
      %p84 = scmp.ne.s32.totalorder %s76, %s78
      %p85 = scmp.eq.s32.totalorder %s26, 1
      %p86 = por %p84, %p85
      %p87 = scmp.ne.s32.totalorder %s78, %s79
      %p88 = scmp.eq.s32.totalorder %s26, 0
      %p89 = por %p87, %p88
      %p90 = scmp.ne.s32.totalorder %s78, %s79
      %p91 = scmp.eq.s32.totalorder %s27, 1
      %p92 = por %p90, %p91
      %p94 = scmp.ne.s32.totalorder %s79, %s93
      %p95 = scmp.eq.s32.totalorder %s27, 0
      %p96 = por %p94, %p95
      %s98 = sadd.s32 %s97, 1
      %p101 = scmp.eq.s32.totalorder %s21, 1
      %p102 = scmp.ne.s32.totalorder %s97, %s99
      %p103 = scmp.eq.s32.totalorder %s21, 0
      %p104 = por %p102, %p103
      %p105 = scmp.ne.s32.totalorder %s97, %s99
      %p106 = scmp.eq.s32.totalorder %s26, 1
      %p107 = por %p105, %p106
      %p108 = scmp.ne.s32.totalorder %s99, %s100
      %p109 = scmp.eq.s32.totalorder %s26, 0
      %p110 = por %p108, %p109
      %p111 = scmp.ne.s32.totalorder %s99, %s100
      %p112 = scmp.eq.s32.totalorder %s27, 1
      %p113 = por %p111, %p112
      %p115 = scmp.ne.s32.totalorder %s100, %s114
      %p116 = scmp.eq.s32.totalorder %s27, 0
      %p117 = por %p115, %p116
      %s119 = sadd.s32 %s118, 1
      %p122 = scmp.eq.s32.totalorder %s21, 1
      %p123 = scmp.ne.s32.totalorder %s118, %s120
      %p124 = scmp.eq.s32.totalorder %s21, 0
      %p125 = por %p123, %p124
      %p126 = scmp.ne.s32.totalorder %s118, %s120
      %p127 = scmp.eq.s32.totalorder %s26, 1
      %p128 = por %p126, %p127
      %p129 = scmp.ne.s32.totalorder %s120, %s121
      %p130 = scmp.eq.s32.totalorder %s26, 0
      %p131 = por %p129, %p130
      %p132 = scmp.ne.s32.totalorder %s120, %s121
      %p133 = scmp.eq.s32.totalorder %s27, 1
      %p134 = por %p132, %p133
      %p136 = scmp.ne.s32.totalorder %s121, %s135
      %p137 = scmp.eq.s32.totalorder %s27, 0
      %p138 = por %p136, %p137
      %s140 = sadd.s32 %s139, 1
      %p143 = scmp.eq.s32.totalorder %s21, 1
      %p144 = scmp.ne.s32.totalorder %s139, %s141
      %p145 = scmp.eq.s32.totalorder %s21, 0
      %p146 = por %p144, %p145
      %p147 = scmp.ne.s32.totalorder %s139, %s141
      %p148 = scmp.eq.s32.totalorder %s26, 1
      %p149 = por %p147, %p148
      %p150 = scmp.ne.s32.totalorder %s141, %s142
      %p151 = scmp.eq.s32.totalorder %s26, 0
      %p152 = por %p150, %p151
      %p153 = scmp.ne.s32.totalorder %s141, %s142
      %p154 = scmp.eq.s32.totalorder %s27, 1
      %p155 = por %p153, %p154
      %p157 = scmp.ne.s32.totalorder %s142, %s156
      %p158 = scmp.eq.s32.totalorder %s27, 0
      %p159 = por %p157, %p158
      %s161 = sadd.s32 %s160, 1
      %p164 = scmp.eq.s32.totalorder %s21, 1
      %p165 = scmp.ne.s32.totalorder %s160, %s162
      %p166 = scmp.eq.s32.totalorder %s21, 0
      %p167 = por %p165, %p166
      %p168 = scmp.ne.s32.totalorder %s160, %s162
      %p169 = scmp.eq.s32.totalorder %s26, 1
      %p170 = por %p168, %p169
      %p171 = scmp.ne.s32.totalorder %s162, %s163
      %p172 = scmp.eq.s32.totalorder %s26, 0
      %p173 = por %p171, %p172
      %p174 = scmp.ne.s32.totalorder %s162, %s163
      %p175 = scmp.eq.s32.totalorder %s27, 1
      %p176 = por %p174, %p175
      %p178 = scmp.ne.s32.totalorder %s163, %s177
      %p179 = scmp.eq.s32.totalorder %s27, 0
      %p180 = por %p178, %p179
      %s181 = ssub.s32 %s21, %s28
      %p182 = scmp.eq.s32.totalorder %s181, 0
      %s184 = sadd.s32 %s183, 1
      %s185 = scalar_select %p182, %s183, %s184
      %p188 = pneg %p182
      %p189 = scmp.eq.s32.totalorder %s21, 1
      %p190 = por %p188, %p189
      %p191 = scmp.ne.s32.totalorder %s183, %s186
      %p192 = scmp.eq.s32.totalorder %s21, 0
      %p193 = por %p191, %p192
      %p194 = scmp.ne.s32.totalorder %s183, %s186
      %p195 = scmp.eq.s32.totalorder %s26, 1
      %p196 = por %p194, %p195
      %p197 = scmp.ne.s32.totalorder %s186, %s187
      %p198 = scmp.eq.s32.totalorder %s26, 0
      %p199 = por %p197, %p198
      %p200 = scmp.ne.s32.totalorder %s186, %s187
      %p201 = scmp.eq.s32.totalorder %s27, 1
      %p202 = por %p200, %p201
      %p204 = scmp.ne.s32.totalorder %s187, %s203
      %p205 = scmp.eq.s32.totalorder %s27, 0
      %p206 = por %p204, %p205
      %p207 = scmp.le.s32.totalorder 1, %s21
      %p208 = scmp.lt.s32.totalorder %s21, 3
      %p209 = pnand %p207, %p208
      %p210 = pneg %p209
      // Predicated region
      $region9: #{tpu_custom_call.1} parent=5 // pred_check
        _
      $region10: #{tpu_custom_call.1} parent=5 // pred_check_branch
        %212 = sbr.rel (%p209) target = $region12
      $region11: #{tpu_custom_call.1} parent=5 // pred_region
        %s213 = ssub.s32 %s21, 1
        // Predicated region
        $region13: #{tpu_custom_call.1} parent=11 // pred_check
          %p214 = pneg %p68
        $region14: #{tpu_custom_call.1} parent=11 // pred_check_branch
          %216 = sbr.rel (%p214) target = $region16
        $region15: #{tpu_custom_call.1} parent=11 // pred_region
          %s218 = ssub.s32 4096, 4096
          %219 = vsyncadd [#allocation7], %s218
          %s220 = sshll.u32 [#allocation6], 4
          %s221 = int_to_ptr.vmem [resolvable:$true] %s220
          %226 = dma.hbm_to_vmem [thread:$0]  %s1, 4096, %s221, [#allocation7], 64, 64, 4
        $region16: #{tpu_custom_call.1} parent=11 // pred_fallthru
          _
        // Predicated region
        $region17: #{tpu_custom_call.1} parent=11 // pred_check
          %p227 = pneg %p89
        $region18: #{tpu_custom_call.1} parent=11 // pred_check_branch
          %229 = sbr.rel (%p227) target = $region20
        $region19: #{tpu_custom_call.1} parent=11 // pred_region
          _
        $region20: #{tpu_custom_call.1} parent=11 // pred_fallthru
          _
        // Predicated region
        $region21: #{tpu_custom_call.1} parent=11 // pred_check
          %p230 = pneg %p110
        $region22: #{tpu_custom_call.1} parent=11 // pred_check_branch
          %232 = sbr.rel (%p230) target = $region24
        $region23: #{tpu_custom_call.1} parent=11 // pred_region
          %s234 = ssub.s32 9216, 9216
          %235 = vsyncadd [#allocation7], %s234
          %s236 = sshll.u32 [#allocation8], 4
          %s237 = int_to_ptr.vmem [resolvable:$true] %s236
          %242 = dma.hbm_to_vmem [thread:$0]  %s3, 9216, %s237, [#allocation7], 64, 64, 4
        $region24: #{tpu_custom_call.1} parent=11 // pred_fallthru
          _
        // Predicated region
        $region25: #{tpu_custom_call.1} parent=11 // pred_check
          %p243 = pneg %p131
        $region26: #{tpu_custom_call.1} parent=11 // pred_check_branch
          %245 = sbr.rel (%p243) target = $region28
        $region27: #{tpu_custom_call.1} parent=11 // pred_region
          _
        $region28: #{tpu_custom_call.1} parent=11 // pred_fallthru
          _
        // Predicated region
        $region29: #{tpu_custom_call.1} parent=11 // pred_check
          %p246 = pneg %p152
        $region30: #{tpu_custom_call.1} parent=11 // pred_check_branch
          %248 = sbr.rel (%p246) target = $region32
        $region31: #{tpu_custom_call.1} parent=11 // pred_region
          %s250 = ssub.s32 4096, 4096
          %251 = vsyncadd [#allocation10], %s250
          %s252 = sshll.u32 [#allocation9], 4
          %s253 = int_to_ptr.vmem [resolvable:$true] %s252
          %258 = dma.hbm_to_vmem [thread:$0]  %s5, 4096, %s253, [#allocation10], 256, 256, 16
        $region32: #{tpu_custom_call.1} parent=11 // pred_fallthru
          _
        // Predicated region
        $region33: #{tpu_custom_call.1} parent=11 // pred_check
          %p259 = pneg %p173
        $region34: #{tpu_custom_call.1} parent=11 // pred_check_branch
          %261 = sbr.rel (%p259) target = $region36
        $region35: #{tpu_custom_call.1} parent=11 // pred_region
          _
        $region36: #{tpu_custom_call.1} parent=11 // pred_fallthru
          _
      $region12: #{tpu_custom_call.1} parent=5 // pred_fallthru
        _
      %p262 = scmp.lt.s32.totalorder %s21, 2
      // Predicated region
      $region37: #{tpu_custom_call.1} parent=5 // pred_check
        %p263 = pneg %p262
      $region38: #{tpu_custom_call.1} parent=5 // pred_check_branch
        %265 = sbr.rel (%p263) target = $region40
      $region39: #{tpu_custom_call.1} parent=5 // pred_region
        // Predicated region
        $region41: #{tpu_custom_call.1} parent=39 // pred_check
          %p266 = pneg %p41
        $region42: #{tpu_custom_call.1} parent=39 // pred_check_branch
          %268 = sbr.rel (%p266) target = $region44
        $region43: #{tpu_custom_call.1} parent=39 // pred_region
          %s269 = sand.u32 %s31, 1
          %s270 = scalar_lea.sflag [#allocation4], %s269
          %s271 = sand.u32 %s31, 1
          %s272 = smul.addr %s271, 128
          %s273 = scalar_lea.vmem [#allocation3], %s272
          %s275 = ssub.s32 2048, 2048
          %276 = vsyncadd %s270, %s275
          %s277 = smul.addr %s21, 32
          %s278 = smul.addr %s277, 64
          %s279 = scalar_lea.hbm %s0, %s278
          %s280 = sshll.u32 %s273, 4
          %s281 = int_to_ptr.vmem [resolvable:$true] %s280
          %286 = dma.hbm_to_vmem [thread:$0]  %s279, 2048, %s281, %s270, 256, 256, 16
        $region44: #{tpu_custom_call.1} parent=39 // pred_fallthru
          _
      $region40: #{tpu_custom_call.1} parent=5 // pred_fallthru
        _
      %p287 = scmp.le.s32.totalorder 1, %s21
      %p288 = scmp.lt.s32.totalorder %s21, 3
      %p289 = pnand %p287, %p288
      %p290 = pneg %p289
      // Predicated region
      $region45: #{tpu_custom_call.1} parent=5 // pred_check
        _
      $region46: #{tpu_custom_call.1} parent=5 // pred_check_branch
        %292 = sbr.rel (%p289) target = $region48
      $region47: #{tpu_custom_call.1} parent=5 // pred_region
        %s293 = ssub.s32 %s21, 1
        %s294 = sand.u32 %s34, 1
        %s295 = scalar_lea.sflag [#allocation4], %s294
        %s296 = sand.u32 %s34, 1
        %s297 = smul.addr %s296, 128
        %s298 = scalar_lea.vmem [#allocation3], %s297
        // Predicated region
        $region49: #{tpu_custom_call.1} parent=47 // pred_check
          %p299 = pneg %p47
        $region50: #{tpu_custom_call.1} parent=47 // pred_check_branch
          %301 = sbr.rel (%p299) target = $region52
        $region51: #{tpu_custom_call.1} parent=47 // pred_region
          %302 = dma.done %s295, 2048
        $region52: #{tpu_custom_call.1} parent=47 // pred_fallthru
          _
        // Predicated region
        $region53: #{tpu_custom_call.1} parent=47 // pred_check
          %p303 = pneg %p68
        $region54: #{tpu_custom_call.1} parent=47 // pred_check_branch
          %305 = sbr.rel (%p303) target = $region56
        $region55: #{tpu_custom_call.1} parent=47 // pred_region
          %306 = dma.done [#allocation7], 4096
        $region56: #{tpu_custom_call.1} parent=47 // pred_fallthru
          _
        // Predicated region
        $region57: #{tpu_custom_call.1} parent=47 // pred_check
          %p307 = pneg %p110
        $region58: #{tpu_custom_call.1} parent=47 // pred_check_branch
          %309 = sbr.rel (%p307) target = $region60
        $region59: #{tpu_custom_call.1} parent=47 // pred_region
          %310 = dma.done [#allocation7], 9216
        $region60: #{tpu_custom_call.1} parent=47 // pred_fallthru
          _
        // Predicated region
        $region61: #{tpu_custom_call.1} parent=47 // pred_check
          %p311 = pneg %p152
        $region62: #{tpu_custom_call.1} parent=47 // pred_check_branch
          %313 = sbr.rel (%p311) target = $region64
        $region63: #{tpu_custom_call.1} parent=47 // pred_region
          %314 = dma.done [#allocation10], 4096
        $region64: #{tpu_custom_call.1} parent=47 // pred_fallthru
          _
        %s315 = sand.u32 %s34, 1
        %s316 = scalar_lea.sflag [#allocation4], %s315
        %s317 = sand.u32 %s34, 1
        %s318 = smul.addr %s317, 128
        %s319 = scalar_lea.vmem [#allocation3], %s318
        %p320 = pneg %p47
        %p321 = pneg %p44
        %p322 = pneg %p68
        %p323 = pneg %p65
        %p324 = pneg %p89
        %p325 = pneg %p86
        %p326 = pneg %p110
        %p327 = pneg %p107
        %p328 = pneg %p131
        %p329 = pneg %p128
        %p330 = pneg %p152
        %p331 = pneg %p149
        %p332 = pneg %p173
        %p333 = pneg %p170
        %p334 = pneg %p199
        %p335 = pneg %p196
        %s336 = sand.u32 %s186, 1
        %s337 = scalar_lea.sflag [#allocation5], %s336
        %s338 = sand.u32 %s186, 1
        %s339 = smul.addr %s338, 128
        %s340 = scalar_lea.vmem [#allocation11], %s339
        %v344 = vld [vmem:[%s298] sm:$0xff]
        %v345 = vld [vmem:[%s298 + $0x8] sm:$0xff]
        %v346 = vld [vmem:[%s298 + $0x10] sm:$0xff]
        %v347 = vld [vmem:[%s298 + $0x18] sm:$0xff]
        %v348 = vld [vmem:[%s298 + $0x20] sm:$0xff]
        %v349 = vld [vmem:[%s298 + $0x28] sm:$0xff]
        %v350 = vld [vmem:[%s298 + $0x30] sm:$0xff]
        %v351 = vld [vmem:[%s298 + $0x38] sm:$0xff]
        %v352 = vld [vmem:[%s298 + $0x40] sm:$0xff]
        %v353 = vld [vmem:[%s298 + $0x48] sm:$0xff]
        %v354 = vld [vmem:[%s298 + $0x50] sm:$0xff]
        %v355 = vld [vmem:[%s298 + $0x58] sm:$0xff]
        %v356 = vld [vmem:[%s298 + $0x60] sm:$0xff]
        %v357 = vld [vmem:[%s298 + $0x68] sm:$0xff]
        %v358 = vld [vmem:[%s298 + $0x70] sm:$0xff]
        %v359 = vld [vmem:[%s298 + $0x78] sm:$0xff]
        %v360 = vld [vmem:[#allocation6] sm:$0xf]
        %v361 = vld [vmem:[#allocation6 + $0x4] sm:$0xf]
        %v362 = vld [vmem:[#allocation6 + $0x8] sm:$0xf]
        %v363 = vld [vmem:[#allocation6 + $0xc] sm:$0xf]
        %v364 = vld [vmem:[#allocation6 + $0x10] sm:$0xf]
        %v365 = vld [vmem:[#allocation6 + $0x14] sm:$0xf]
        %v366 = vld [vmem:[#allocation6 + $0x18] sm:$0xf]
        %v367 = vld [vmem:[#allocation6 + $0x1c] sm:$0xf]
        %v368 = vld [vmem:[#allocation6 + $0x20] sm:$0xf]
        %v369 = vld [vmem:[#allocation6 + $0x24] sm:$0xf]
        %v370 = vld [vmem:[#allocation6 + $0x28] sm:$0xf]
        %v371 = vld [vmem:[#allocation6 + $0x2c] sm:$0xf]
        %v372 = vld [vmem:[#allocation6 + $0x30] sm:$0xf]
        %v373 = vld [vmem:[#allocation6 + $0x34] sm:$0xf]
        %v374 = vld [vmem:[#allocation6 + $0x38] sm:$0xf]
        %v375 = vld [vmem:[#allocation6 + $0x3c] sm:$0xf]
        %v376 = vld [vmem:[#allocation6 + $0x40] sm:$0xf]
        %v377 = vld [vmem:[#allocation6 + $0x44] sm:$0xf]
        %v378 = vld [vmem:[#allocation6 + $0x48] sm:$0xf]
        %v379 = vld [vmem:[#allocation6 + $0x4c] sm:$0xf]
        %v380 = vld [vmem:[#allocation6 + $0x50] sm:$0xf]
        %v381 = vld [vmem:[#allocation6 + $0x54] sm:$0xf]
        %v382 = vld [vmem:[#allocation6 + $0x58] sm:$0xf]
        %v383 = vld [vmem:[#allocation6 + $0x5c] sm:$0xf]
        %v384 = vld [vmem:[#allocation6 + $0x60] sm:$0xf]
        %v385 = vld [vmem:[#allocation6 + $0x64] sm:$0xf]
        %v386 = vld [vmem:[#allocation6 + $0x68] sm:$0xf]
        %v387 = vld [vmem:[#allocation6 + $0x6c] sm:$0xf]
        %v388 = vld [vmem:[#allocation6 + $0x70] sm:$0xf]
        %v389 = vld [vmem:[#allocation6 + $0x74] sm:$0xf]
        %v390 = vld [vmem:[#allocation6 + $0x78] sm:$0xf]
        %v391 = vld [vmem:[#allocation6 + $0x7c] sm:$0xf]
        %v392 = vld [vmem:[#allocation6 + $0x80] sm:$0xf]
        %v393 = vld [vmem:[#allocation6 + $0x84] sm:$0xf]
        %v394 = vld [vmem:[#allocation6 + $0x88] sm:$0xf]
        %v395 = vld [vmem:[#allocation6 + $0x8c] sm:$0xf]
        %v396 = vld [vmem:[#allocation6 + $0x90] sm:$0xf]
        %v397 = vld [vmem:[#allocation6 + $0x94] sm:$0xf]
        %v398 = vld [vmem:[#allocation6 + $0x98] sm:$0xf]
        %v399 = vld [vmem:[#allocation6 + $0x9c] sm:$0xf]
        %v400 = vld [vmem:[#allocation6 + $0xa0] sm:$0xf]
        %v401 = vld [vmem:[#allocation6 + $0xa4] sm:$0xf]
        %v402 = vld [vmem:[#allocation6 + $0xa8] sm:$0xf]
        %v403 = vld [vmem:[#allocation6 + $0xac] sm:$0xf]
        %v404 = vld [vmem:[#allocation6 + $0xb0] sm:$0xf]
        %v405 = vld [vmem:[#allocation6 + $0xb4] sm:$0xf]
        %v406 = vld [vmem:[#allocation6 + $0xb8] sm:$0xf]
        %v407 = vld [vmem:[#allocation6 + $0xbc] sm:$0xf]
        %v408 = vld [vmem:[#allocation6 + $0xc0] sm:$0xf]
        %v409 = vld [vmem:[#allocation6 + $0xc4] sm:$0xf]
        %v410 = vld [vmem:[#allocation6 + $0xc8] sm:$0xf]
        %v411 = vld [vmem:[#allocation6 + $0xcc] sm:$0xf]
        %v412 = vld [vmem:[#allocation6 + $0xd0] sm:$0xf]
        %v413 = vld [vmem:[#allocation6 + $0xd4] sm:$0xf]
        %v414 = vld [vmem:[#allocation6 + $0xd8] sm:$0xf]
        %v415 = vld [vmem:[#allocation6 + $0xdc] sm:$0xf]
        %v416 = vld [vmem:[#allocation6 + $0xe0] sm:$0xf]
        %v417 = vld [vmem:[#allocation6 + $0xe4] sm:$0xf]
        %v418 = vld [vmem:[#allocation6 + $0xe8] sm:$0xf]
        %v419 = vld [vmem:[#allocation6 + $0xec] sm:$0xf]
        %v420 = vld [vmem:[#allocation6 + $0xf0] sm:$0xf]
        %v421 = vld [vmem:[#allocation6 + $0xf4] sm:$0xf]
        %v422 = vld [vmem:[#allocation6 + $0xf8] sm:$0xf]
        %v423 = vld [vmem:[#allocation6 + $0xfc] sm:$0xf]
        %v424 = vld [vmem:[%s2] sm:$0x1]
        %v426 = vlaneseq
        %v427 = vshrl.u32 %v426, 7
        %v428 = vsub.s32 0, %v427
        %v429 = vrot.slane %v424, %v428
        %v447 = vunpack.c.l.b16 %v344
        %v448 = vunpack.c.h.b16 %v344
        %v449 = vunpack.c.l.b16 %v345
        %v450 = vunpack.c.h.b16 %v345
        %v451 = vunpack.c.l.b16 %v346
        %v452 = vunpack.c.h.b16 %v346
        %v453 = vunpack.c.l.b16 %v347
        %v454 = vunpack.c.h.b16 %v347
        %v455 = vunpack.c.l.b16 %v348
        %v456 = vunpack.c.h.b16 %v348
        %v457 = vunpack.c.l.b16 %v349
        %v458 = vunpack.c.h.b16 %v349
        %v459 = vunpack.c.l.b16 %v350
        %v460 = vunpack.c.h.b16 %v350
        %v461 = vunpack.c.l.b16 %v351
        %v462 = vunpack.c.h.b16 %v351
        %v463 = vunpack.c.l.b16 %v352
        %v464 = vunpack.c.h.b16 %v352
        %v465 = vunpack.c.l.b16 %v353
        %v466 = vunpack.c.h.b16 %v353
        %v467 = vunpack.c.l.b16 %v354
        %v468 = vunpack.c.h.b16 %v354
        %v469 = vunpack.c.l.b16 %v355
        %v470 = vunpack.c.h.b16 %v355
        %v471 = vunpack.c.l.b16 %v356
        %v472 = vunpack.c.h.b16 %v356
        %v473 = vunpack.c.l.b16 %v357
        %v474 = vunpack.c.h.b16 %v357
        %v475 = vunpack.c.l.b16 %v358
        %v476 = vunpack.c.h.b16 %v358
        %v477 = vunpack.c.l.b16 %v359
        %v478 = vunpack.c.h.b16 %v359
        %v479 = vpack.c.b16 %v451, %v447
        %v480 = vpack.c.b16 %v452, %v448
        %v481 = vpack.c.b16 %v453, %v449
        %v482 = vpack.c.b16 %v454, %v450
        %v483 = vpack.c.b16 %v459, %v455
        %v484 = vpack.c.b16 %v460, %v456
        %v485 = vpack.c.b16 %v461, %v457
        %v486 = vpack.c.b16 %v462, %v458
        %v487 = vpack.c.b16 %v467, %v463
        %v488 = vpack.c.b16 %v468, %v464
        %v489 = vpack.c.b16 %v469, %v465
        %v490 = vpack.c.b16 %v470, %v466
        %v491 = vpack.c.b16 %v475, %v471
        %v492 = vpack.c.b16 %v476, %v472
        %v493 = vpack.c.b16 %v477, %v473
        %v494 = vpack.c.b16 %v478, %v474
        %v575 = vunpack.c.l.b16 %v360
        %v576 = vunpack.c.l.b16 %v361
        %v577 = vunpack.c.l.b16 %v362
        %v578 = vunpack.c.l.b16 %v363
        %v579 = vunpack.c.l.b16 %v364
        %v580 = vunpack.c.l.b16 %v365
        %v581 = vunpack.c.l.b16 %v366
        %v582 = vunpack.c.l.b16 %v367
        %v583 = vunpack.c.l.b16 %v368
        %v584 = vunpack.c.l.b16 %v369
        %v585 = vunpack.c.l.b16 %v370
        %v586 = vunpack.c.l.b16 %v371
        %v587 = vunpack.c.l.b16 %v372
        %v588 = vunpack.c.l.b16 %v373
        %v589 = vunpack.c.l.b16 %v374
        %v590 = vunpack.c.l.b16 %v375
        %v591 = vunpack.c.l.b16 %v376
        %v592 = vunpack.c.l.b16 %v377
        %v593 = vunpack.c.l.b16 %v378
        %v594 = vunpack.c.l.b16 %v379
        %v595 = vunpack.c.l.b16 %v380
        %v596 = vunpack.c.l.b16 %v381
        %v597 = vunpack.c.l.b16 %v382
        %v598 = vunpack.c.l.b16 %v383
        %v599 = vunpack.c.l.b16 %v384
        %v600 = vunpack.c.l.b16 %v385
        %v601 = vunpack.c.l.b16 %v386
        %v602 = vunpack.c.l.b16 %v387
        %v603 = vunpack.c.l.b16 %v388
        %v604 = vunpack.c.l.b16 %v389
        %v605 = vunpack.c.l.b16 %v390
        %v606 = vunpack.c.l.b16 %v391
        %v607 = vunpack.c.l.b16 %v392
        %v608 = vunpack.c.l.b16 %v393
        %v609 = vunpack.c.l.b16 %v394
        %v610 = vunpack.c.l.b16 %v395
        %v611 = vunpack.c.l.b16 %v396
        %v612 = vunpack.c.l.b16 %v397
        %v613 = vunpack.c.l.b16 %v398
        %v614 = vunpack.c.l.b16 %v399
        %v615 = vunpack.c.l.b16 %v400
        %v616 = vunpack.c.l.b16 %v401
        %v617 = vunpack.c.l.b16 %v402
        %v618 = vunpack.c.l.b16 %v403
        %v619 = vunpack.c.l.b16 %v404
        %v620 = vunpack.c.l.b16 %v405
        %v621 = vunpack.c.l.b16 %v406
        %v622 = vunpack.c.l.b16 %v407
        %v623 = vunpack.c.l.b16 %v408
        %v624 = vunpack.c.l.b16 %v409
        %v625 = vunpack.c.l.b16 %v410
        %v626 = vunpack.c.l.b16 %v411
        %v627 = vunpack.c.l.b16 %v412
        %v628 = vunpack.c.l.b16 %v413
        %v629 = vunpack.c.l.b16 %v414
        %v630 = vunpack.c.l.b16 %v415
        %v631 = vunpack.c.l.b16 %v416
        %v632 = vunpack.c.l.b16 %v417
        %v633 = vunpack.c.l.b16 %v418
        %v634 = vunpack.c.l.b16 %v419
        %v635 = vunpack.c.l.b16 %v420
        %v636 = vunpack.c.l.b16 %v421
        %v637 = vunpack.c.l.b16 %v422
        %v638 = vunpack.c.l.b16 %v423
        %v639 = vpack.c.b16 %v576, %v575
        %v640 = vpack.c.b16 %v578, %v577
        %v641 = vpack.c.b16 %v580, %v579
        %v642 = vpack.c.b16 %v582, %v581
        %v643 = vpack.c.b16 %v584, %v583
        %v644 = vpack.c.b16 %v586, %v585
        %v645 = vpack.c.b16 %v588, %v587
        %v646 = vpack.c.b16 %v590, %v589
        %v647 = vpack.c.b16 %v592, %v591
        %v648 = vpack.c.b16 %v594, %v593
        %v649 = vpack.c.b16 %v596, %v595
        %v650 = vpack.c.b16 %v598, %v597
        %v651 = vpack.c.b16 %v600, %v599
        %v652 = vpack.c.b16 %v602, %v601
        %v653 = vpack.c.b16 %v604, %v603
        %v654 = vpack.c.b16 %v606, %v605
        %v655 = vpack.c.b16 %v608, %v607
        %v656 = vpack.c.b16 %v610, %v609
        %v657 = vpack.c.b16 %v612, %v611
        %v658 = vpack.c.b16 %v614, %v613
        %v659 = vpack.c.b16 %v616, %v615
        %v660 = vpack.c.b16 %v618, %v617
        %v661 = vpack.c.b16 %v620, %v619
        %v662 = vpack.c.b16 %v622, %v621
        %v663 = vpack.c.b16 %v624, %v623
        %v664 = vpack.c.b16 %v626, %v625
        %v665 = vpack.c.b16 %v628, %v627
        %v666 = vpack.c.b16 %v630, %v629
        %v667 = vpack.c.b16 %v632, %v631
        %v668 = vpack.c.b16 %v634, %v633
        %v669 = vpack.c.b16 %v636, %v635
        %v670 = vpack.c.b16 %v638, %v637
        %703 = vmatprep.subr.bf16.mxu0 0
        %704 = vmatpush1.bf16.msra.mxu0 %v639
        %705 = vmatprep.subr.bf16.mxu0 0
        %706 = vmatpush1.bf16.msra.mxu0 %v640
        %707 = vmatprep.subr.bf16.mxu0 0
        %708 = vmatpush1.bf16.msra.mxu0 %v641
        %709 = vmatprep.subr.bf16.mxu0 0
        %710 = vmatpush1.bf16.msra.mxu0 %v642
        %711 = vmatprep.subr.bf16.mxu0 0
        %712 = vmatpush1.bf16.msra.mxu0 %v643
        %713 = vmatprep.subr.bf16.mxu0 0
        %714 = vmatpush1.bf16.msra.mxu0 %v644
        %715 = vmatprep.subr.bf16.mxu0 0
        %716 = vmatpush1.bf16.msra.mxu0 %v645
        %717 = vmatprep.subr.bf16.mxu0 0
        %718 = vmatpush1.bf16.msra.mxu0 %v646
        %719 = vmatprep.subr.bf16.mxu0 0
        %720 = vmatpush1.bf16.msra.mxu0 %v647
        %721 = vmatprep.subr.bf16.mxu0 0
        %722 = vmatpush1.bf16.msra.mxu0 %v648
        %723 = vmatprep.subr.bf16.mxu0 0
        %724 = vmatpush1.bf16.msra.mxu0 %v649
        %725 = vmatprep.subr.bf16.mxu0 0
        %726 = vmatpush1.bf16.msra.mxu0 %v650
        %727 = vmatprep.subr.bf16.mxu0 0
        %728 = vmatpush1.bf16.msra.mxu0 %v651
        %729 = vmatprep.subr.bf16.mxu0 0
        %730 = vmatpush1.bf16.msra.mxu0 %v652
        %731 = vmatprep.subr.bf16.mxu0 0
        %732 = vmatpush1.bf16.msra.mxu0 %v653
        %733 = vmatprep.subr.bf16.mxu0 0
        %734 = vmatpush1.bf16.msra.mxu0 %v654
        %735 = vmatprep.mubr.bf16.mxu0 %v480
        %736 = vmatmul.mubr.bf16.gmra.mrb[0].mxu0 %v479
        %v737 = vpop.f32.mrb[0].mxu0
        %v738 = vadd.f32 %v429, %v737
        %v739 = vpop.f32.mrb[0].mxu0
        %v740 = vpop.f32.mrb[0].mxu0
        %v741 = vadd.f32 %v429, %v740
        %v742 = vpop.f32.mrb[0].mxu0
        %743 = vmatprep.mubr.bf16.mxu0 %v484
        %744 = vmatmul.mubr.bf16.gmra.mrb[0].mxu0 %v483
        %v745 = vpop.f32.mrb[0].mxu0
        %v746 = vadd.f32 %v429, %v745
        %v747 = vpop.f32.mrb[0].mxu0
        %v748 = vpop.f32.mrb[0].mxu0
        %v749 = vadd.f32 %v429, %v748
        %v750 = vpop.f32.mrb[0].mxu0
        %751 = vmatprep.mubr.bf16.mxu0 %v488
        %752 = vmatmul.mubr.bf16.gmra.mrb[0].mxu0 %v487
        %v753 = vpop.f32.mrb[0].mxu0
        %v754 = vadd.f32 %v429, %v753
        %v755 = vpop.f32.mrb[0].mxu0
        %v756 = vpop.f32.mrb[0].mxu0
        %v757 = vadd.f32 %v429, %v756
        %v758 = vpop.f32.mrb[0].mxu0
        %759 = vmatprep.mubr.bf16.mxu0 %v492
        %760 = vmatmul.mubr.bf16.gmra.mrb[0].mxu0 %v491
        %v761 = vpop.f32.mrb[0].mxu0
        %v762 = vadd.f32 %v429, %v761
        %v763 = vpop.f32.mrb[0].mxu0
        %v764 = vpop.f32.mrb[0].mxu0
        %v765 = vadd.f32 %v429, %v764
        %v766 = vpop.f32.mrb[0].mxu0
        %767 = vdwg.mxu0
        %768 = vmatprep.subr.bf16.mxu0 0
        %769 = vmatpush1.bf16.msra.mxu0 %v655
        %770 = vmatprep.subr.bf16.mxu0 0
        %771 = vmatpush1.bf16.msra.mxu0 %v656
        %772 = vmatprep.subr.bf16.mxu0 0
        %773 = vmatpush1.bf16.msra.mxu0 %v657
        %774 = vmatprep.subr.bf16.mxu0 0
        %775 = vmatpush1.bf16.msra.mxu0 %v658
        %776 = vmatprep.subr.bf16.mxu0 0
        %777 = vmatpush1.bf16.msra.mxu0 %v659
        %778 = vmatprep.subr.bf16.mxu0 0
        %779 = vmatpush1.bf16.msra.mxu0 %v660
        %780 = vmatprep.subr.bf16.mxu0 0
        %781 = vmatpush1.bf16.msra.mxu0 %v661
        %782 = vmatprep.subr.bf16.mxu0 0
        %783 = vmatpush1.bf16.msra.mxu0 %v662
        %784 = vmatprep.subr.bf16.mxu0 0
        %785 = vmatpush1.bf16.msra.mxu0 %v663
        %786 = vmatprep.subr.bf16.mxu0 0
        %787 = vmatpush1.bf16.msra.mxu0 %v664
        %788 = vmatprep.subr.bf16.mxu0 0
        %789 = vmatpush1.bf16.msra.mxu0 %v665
        %790 = vmatprep.subr.bf16.mxu0 0
        %791 = vmatpush1.bf16.msra.mxu0 %v666
        %792 = vmatprep.subr.bf16.mxu0 0
        %793 = vmatpush1.bf16.msra.mxu0 %v667
        %794 = vmatprep.subr.bf16.mxu0 0
        %795 = vmatpush1.bf16.msra.mxu0 %v668
        %796 = vmatprep.subr.bf16.mxu0 0
        %797 = vmatpush1.bf16.msra.mxu0 %v669
        %798 = vmatprep.subr.bf16.mxu0 0
        %799 = vmatpush1.bf16.msra.mxu0 %v670
        %800 = vmatprep.mubr.bf16.mxu0 %v482
        %801 = vmatmul.mubr.bf16.gmra.mrb[0].mxu0 %v481
        %v802 = vpop.f32.mrb[0].mxu0
        %v803 = vadd.f32 %v738, %v802
        %v804 = vpop.f32.mrb[0].mxu0
        %v805 = vpop.f32.mrb[0].mxu0
        %v806 = vadd.f32 %v741, %v805
        %v807 = vpop.f32.mrb[0].mxu0
        %808 = vmatprep.mubr.bf16.mxu0 %v486
        %809 = vmatmul.mubr.bf16.gmra.mrb[0].mxu0 %v485
        %v810 = vpop.f32.mrb[0].mxu0
        %v811 = vadd.f32 %v746, %v810
        %v812 = vpop.f32.mrb[0].mxu0
        %v813 = vpop.f32.mrb[0].mxu0
        %v814 = vadd.f32 %v749, %v813
        %v815 = vpop.f32.mrb[0].mxu0
        %816 = vmatprep.mubr.bf16.mxu0 %v490
        %817 = vmatmul.mubr.bf16.gmra.mrb[0].mxu0 %v489
        %v818 = vpop.f32.mrb[0].mxu0
        %v819 = vadd.f32 %v754, %v818
        %v820 = vpop.f32.mrb[0].mxu0
        %v821 = vpop.f32.mrb[0].mxu0
        %v822 = vadd.f32 %v757, %v821
        %v823 = vpop.f32.mrb[0].mxu0
        %824 = vmatprep.mubr.bf16.mxu0 %v494
        %825 = vmatmul.mubr.bf16.gmra.mrb[0].mxu0 %v493
        %v826 = vpop.f32.mrb[0].mxu0
        %v827 = vadd.f32 %v762, %v826
        %v828 = vpop.f32.mrb[0].mxu0
        %v829 = vpop.f32.mrb[0].mxu0
        %v830 = vadd.f32 %v765, %v829
        %v831 = vpop.f32.mrb[0].mxu0
        %832 = vdwg.mxu0
        %v833 = vmax.f32 %v803, 0.0
        %v834 = vmax.f32 %v806, 0.0
        %v835 = vmax.f32 %v811, 0.0
        %v836 = vmax.f32 %v814, 0.0
        %v837 = vmax.f32 %v819, 0.0
        %v838 = vmax.f32 %v822, 0.0
        %v839 = vmax.f32 %v827, 0.0
        %v840 = vmax.f32 %v830, 0.0
        %v841 = vpack.c.bf16 %v834, %v833
        %v842 = vpack.c.bf16 %v836, %v835
        %v843 = vpack.c.bf16 %v838, %v837
        %v844 = vpack.c.bf16 %v840, %v839
        %845 = vst [vmem:[#allocation2] sm:$0xff] 0
        %846 = vst [vmem:[#allocation2 + $0x28] sm:$0xff] 0
        %847 = vst [vmem:[#allocation2 + $0x8] sm:$0xff] %v841
        %848 = vst [vmem:[#allocation2 + $0x10] sm:$0xff] %v842
        %849 = vst [vmem:[#allocation2 + $0x18] sm:$0xff] %v843
        %850 = vst [vmem:[#allocation2 + $0x20] sm:$0xff] %v844
        %v851 = vlaneseq
        %v852 = vshrl.u32 %v851, 7
        %v853 = vadd.s32 %v852, 8
        %v854 = vadd.s32 %v852, 16
        %v855 = vadd.s32 %v852, 24
        %v856 = vadd.s32 %v852, 32
        %v857 = vadd.s32 %v852, 40
        %v858 = vadd.s32 %v852, 48
        %v859 = vadd.s32 %v852, 56
        %vm860 = vcmp.lt.s32.totalorder %v852, 0
        %v861 = vsub.s32 0, %v852
        %v862 = vsel %vm860, %v861, %v852
        %v863 = vshrl.u32 %v862, 3
        %v864 = vand.u32 %v862, 7
        %v865 = vsub.s32 0, %v864
        %v866 = vsel %vm860, %v865, %v864
        %vm867 = vcmp.lt.s32.totalorder %v853, 0
        %v868 = vsub.s32 0, %v853
        %v869 = vsel %vm867, %v868, %v853
        %v870 = vshrl.u32 %v869, 3
        %v871 = vand.u32 %v869, 7
        %v872 = vsub.s32 0, %v871
        %v873 = vsel %vm867, %v872, %v871
        %vm874 = vcmp.lt.s32.totalorder %v854, 0
        %v875 = vsub.s32 0, %v854
        %v876 = vsel %vm874, %v875, %v854
        %v877 = vshrl.u32 %v876, 3
        %v878 = vand.u32 %v876, 7
        %v879 = vsub.s32 0, %v878
        %v880 = vsel %vm874, %v879, %v878
        %vm881 = vcmp.lt.s32.totalorder %v855, 0
        %v882 = vsub.s32 0, %v855
        %v883 = vsel %vm881, %v882, %v855
        %v884 = vshrl.u32 %v883, 3
        %v885 = vand.u32 %v883, 7
        %v886 = vsub.s32 0, %v885
        %v887 = vsel %vm881, %v886, %v885
        %vm888 = vcmp.lt.s32.totalorder %v856, 0
        %v889 = vsub.s32 0, %v856
        %v890 = vsel %vm888, %v889, %v856
        %v891 = vshrl.u32 %v890, 3
        %v892 = vand.u32 %v890, 7
        %v893 = vsub.s32 0, %v892
        %v894 = vsel %vm888, %v893, %v892
        %vm895 = vcmp.lt.s32.totalorder %v857, 0
        %v896 = vsub.s32 0, %v857
        %v897 = vsel %vm895, %v896, %v857
        %v898 = vshrl.u32 %v897, 3
        %v899 = vand.u32 %v897, 7
        %v900 = vsub.s32 0, %v899
        %v901 = vsel %vm895, %v900, %v899
        %vm902 = vcmp.lt.s32.totalorder %v858, 0
        %v903 = vsub.s32 0, %v858
        %v904 = vsel %vm902, %v903, %v858
        %v905 = vshrl.u32 %v904, 3
        %v906 = vand.u32 %v904, 7
        %v907 = vsub.s32 0, %v906
        %v908 = vsel %vm902, %v907, %v906
        %vm909 = vcmp.lt.s32.totalorder %v859, 0
        %v910 = vsub.s32 0, %v859
        %v911 = vsel %vm909, %v910, %v859
        %v912 = vshrl.u32 %v911, 3
        %v913 = vand.u32 %v911, 7
        %v914 = vsub.s32 0, %v913
        %v915 = vsel %vm909, %v914, %v913
        %vm916 = vcmp.ne.s32.totalorder %v866, 0
        %vm917 = vcmp.ne.s32.totalorder %v873, 0
        %vm918 = vcmp.ne.s32.totalorder %v880, 0
        %vm919 = vcmp.ne.s32.totalorder %v887, 0
        %vm920 = vcmp.ne.s32.totalorder %v894, 0
        %vm921 = vcmp.ne.s32.totalorder %v901, 0
        %vm922 = vcmp.ne.s32.totalorder %v908, 0
        %vm923 = vcmp.ne.s32.totalorder %v915, 0
        %vm924 = vcmp.lt.s32.totalorder %v866, 0
        %vm925 = vcmp.lt.s32.totalorder %v873, 0
        %vm926 = vcmp.lt.s32.totalorder %v880, 0
        %vm927 = vcmp.lt.s32.totalorder %v887, 0
        %vm928 = vcmp.lt.s32.totalorder %v894, 0
        %vm929 = vcmp.lt.s32.totalorder %v901, 0
        %vm930 = vcmp.lt.s32.totalorder %v908, 0
        %vm931 = vcmp.lt.s32.totalorder %v915, 0
        %vm932 = vmand %vm924, %vm916
        %vm933 = vmand %vm925, %vm917
        %vm934 = vmand %vm926, %vm918
        %vm935 = vmand %vm927, %vm919
        %vm936 = vmand %vm928, %vm920
        %vm937 = vmand %vm929, %vm921
        %vm938 = vmand %vm930, %vm922
        %vm939 = vmand %vm931, %vm923
        %v940 = vadd.s32 %v866, 8
        %v941 = vadd.s32 %v873, 8
        %v942 = vadd.s32 %v880, 8
        %v943 = vadd.s32 %v887, 8
        %v944 = vadd.s32 %v894, 8
        %v945 = vadd.s32 %v901, 8
        %v946 = vadd.s32 %v908, 8
        %v947 = vadd.s32 %v915, 8
        %v948 = vsel %vm932, %v940, %v866
        %v949 = vsel %vm933, %v941, %v873
        %v950 = vsel %vm934, %v942, %v880
        %v951 = vsel %vm935, %v943, %v887
        %v952 = vsel %vm936, %v944, %v894
        %v953 = vsel %vm937, %v945, %v901
        %v954 = vsel %vm938, %v946, %v908
        %v955 = vsel %vm939, %v947, %v915
        %vm956 = vcmp.ne.s32.totalorder %v948, 0
        %vm957 = vcmp.ne.s32.totalorder %v949, 0
        %vm958 = vcmp.ne.s32.totalorder %v950, 0
        %vm959 = vcmp.ne.s32.totalorder %v951, 0
        %vm960 = vcmp.ne.s32.totalorder %v952, 0
        %vm961 = vcmp.ne.s32.totalorder %v953, 0
        %vm962 = vcmp.ne.s32.totalorder %v954, 0
        %vm963 = vcmp.ne.s32.totalorder %v955, 0
        %vm964 = vcmp.ne.s32.totalorder %v948, 7
        %vm965 = vcmp.ne.s32.totalorder %v949, 7
        %vm966 = vcmp.ne.s32.totalorder %v950, 7
        %vm967 = vcmp.ne.s32.totalorder %v951, 7
        %vm968 = vcmp.ne.s32.totalorder %v952, 7
        %vm969 = vcmp.ne.s32.totalorder %v953, 7
        %vm970 = vcmp.ne.s32.totalorder %v954, 7
        %vm971 = vcmp.ne.s32.totalorder %v955, 7
        %v972 = vld [vmem:[#allocation2] sm:$0xf8]
        %v973 = vld [vmem:[#allocation2 + $0x8] sm:$0xff]
        %v974 = vld [vmem:[#allocation2 + $0x10] sm:$0xff]
        %v975 = vld [vmem:[#allocation2 + $0x18] sm:$0xff]
        %v976 = vld [vmem:[#allocation2 + $0x20] sm:$0xf]
        %v977 = vsel %vm956, 1, 0
        %v978 = vsel %vm957, 1, 0
        %v979 = vsel %vm958, 1, 0
        %v980 = vsel %vm959, 1, 0
        %v981 = vsel %vm960, 1, 0
        %v982 = vsel %vm961, 1, 0
        %v983 = vsel %vm962, 1, 0
        %v984 = vsel %vm963, 1, 0
        %vm985 = vcmp.eq.s32.totalorder %v977, 1
        %vm986 = vcmp.eq.s32.totalorder %v978, 1
        %vm987 = vcmp.eq.s32.totalorder %v979, 1
        %vm988 = vcmp.eq.s32.totalorder %v980, 1
        %vm989 = vcmp.eq.s32.totalorder %v981, 1
        %vm990 = vcmp.eq.s32.totalorder %v982, 1
        %vm991 = vcmp.eq.s32.totalorder %v983, 1
        %vm992 = vcmp.eq.s32.totalorder %v984, 1
        %vm993 = vmpackc.low %vm985, %vm985
        %vm994 = vmpackc.low %vm986, %vm986
        %vm995 = vmpackc.low %vm987, %vm987
        %vm996 = vmpackc.low %vm988, %vm988
        %vm997 = vmpackc.low %vm989, %vm989
        %vm998 = vmpackc.low %vm990, %vm990
        %vm999 = vmpackc.low %vm991, %vm991
        %vm1000 = vmpackc.low %vm992, %vm992
        %v1001 = vsel %vm993, 65537, 0
        %v1002 = vsel %vm994, 65537, 0
        %v1003 = vsel %vm995, 65537, 0
        %v1004 = vsel %vm996, 65537, 0
        %v1005 = vsel %vm997, 65537, 0
        %v1006 = vsel %vm998, 65537, 0
        %v1007 = vsel %vm999, 65537, 0
        %v1008 = vsel %vm1000, 65537, 0
        %v1009 = vunpack.c.l.b16 %v1001
        %v1010 = vunpack.c.l.b16 %v1002
        %v1011 = vunpack.c.l.b16 %v1003
        %v1012 = vunpack.c.l.b16 %v1004
        %v1013 = vunpack.c.l.b16 %v1005
        %v1014 = vunpack.c.l.b16 %v1006
        %v1015 = vunpack.c.l.b16 %v1007
        %v1016 = vunpack.c.l.b16 %v1008
        %v1017 = vpack.c.b16 %v1010, %v1009
        %v1018 = vpack.c.b16 %v1012, %v1011
        %v1019 = vpack.c.b16 %v1014, %v1013
        %v1020 = vpack.c.b16 %v1016, %v1015
        %vm1021 = vsmask.f32 3328
        %v1023 = vshrl.u32 %v1017, 16
        %v1025 = vrot.slane %v1023, 4
        %v1026 = vshll.u32 %v1017, 16
        %v1028 = vrot.slane %v1026, 5
        %v1029 = vor.u32 %v1025, %v1028
        %v1031 = vshrl.u32 %v1018, 16
        %v1033 = vrot.slane %v1031, 4
        %v1034 = vshll.u32 %v1018, 16
        %v1036 = vrot.slane %v1034, 5
        %v1037 = vor.u32 %v1033, %v1036
        %v1038 = vsel %vm1021, %v1029, %v1037
        %v1040 = vshrl.u32 %v1019, 16
        %v1042 = vrot.slane %v1040, 4
        %v1043 = vshll.u32 %v1019, 16
        %v1045 = vrot.slane %v1043, 5
        %v1046 = vor.u32 %v1042, %v1045
        %v1047 = vsel %vm1021, %v1037, %v1046
        %v1049 = vshrl.u32 %v1020, 16
        %v1051 = vrot.slane %v1049, 4
        %v1052 = vshll.u32 %v1020, 16
        %v1054 = vrot.slane %v1052, 5
        %v1055 = vor.u32 %v1051, %v1054
        %v1056 = vsel %vm1021, %v1046, %v1055
        %vm1057 = vcmp.ne.s16.totalorder %v1029, 0
        %vm1058 = vcmp.ne.s16.totalorder %v1038, 0
        %vm1059 = vcmp.ne.s16.totalorder %v1047, 0
        %vm1060 = vcmp.ne.s16.totalorder %v1056, 0
        %vm1061 = vcmp.ne.s16.totalorder %v1055, 0
        %v1062 = vsel %vm1057, %v972, 0
        %v1063 = vsel %vm1058, %v973, 0
        %v1064 = vsel %vm1059, %v974, 0
        %v1065 = vsel %vm1060, %v975, 0
        %v1066 = vsel %vm1061, %v976, 0
        %v1067 = vld [vmem:[#allocation2] sm:$0xf0]
        %v1068 = vld [vmem:[#allocation2 + $0x20] sm:$0x1f]
        %v1069 = vsel %vm964, 1, 0
        %v1070 = vsel %vm965, 1, 0
        %v1071 = vsel %vm966, 1, 0
        %v1072 = vsel %vm967, 1, 0
        %v1073 = vsel %vm968, 1, 0
        %v1074 = vsel %vm969, 1, 0
        %v1075 = vsel %vm970, 1, 0
        %v1076 = vsel %vm971, 1, 0
        %vm1077 = vcmp.eq.s32.totalorder %v1069, 1
        %vm1078 = vcmp.eq.s32.totalorder %v1070, 1
        %vm1079 = vcmp.eq.s32.totalorder %v1071, 1
        %vm1080 = vcmp.eq.s32.totalorder %v1072, 1
        %vm1081 = vcmp.eq.s32.totalorder %v1073, 1
        %vm1082 = vcmp.eq.s32.totalorder %v1074, 1
        %vm1083 = vcmp.eq.s32.totalorder %v1075, 1
        %vm1084 = vcmp.eq.s32.totalorder %v1076, 1
        %vm1085 = vmpackc.low %vm1077, %vm1077
        %vm1086 = vmpackc.low %vm1078, %vm1078
        %vm1087 = vmpackc.low %vm1079, %vm1079
        %vm1088 = vmpackc.low %vm1080, %vm1080
        %vm1089 = vmpackc.low %vm1081, %vm1081
        %vm1090 = vmpackc.low %vm1082, %vm1082
        %vm1091 = vmpackc.low %vm1083, %vm1083
        %vm1092 = vmpackc.low %vm1084, %vm1084
        %v1093 = vsel %vm1085, 65537, 0
        %v1094 = vsel %vm1086, 65537, 0
        %v1095 = vsel %vm1087, 65537, 0
        %v1096 = vsel %vm1088, 65537, 0
        %v1097 = vsel %vm1089, 65537, 0
        %v1098 = vsel %vm1090, 65537, 0
        %v1099 = vsel %vm1091, 65537, 0
        %v1100 = vsel %vm1092, 65537, 0
        %v1101 = vunpack.c.l.b16 %v1093
        %v1102 = vunpack.c.l.b16 %v1094
        %v1103 = vunpack.c.l.b16 %v1095
        %v1104 = vunpack.c.l.b16 %v1096
        %v1105 = vunpack.c.l.b16 %v1097
        %v1106 = vunpack.c.l.b16 %v1098
        %v1107 = vunpack.c.l.b16 %v1099
        %v1108 = vunpack.c.l.b16 %v1100
        %v1109 = vpack.c.b16 %v1102, %v1101
        %v1110 = vpack.c.b16 %v1104, %v1103
        %v1111 = vpack.c.b16 %v1106, %v1105
        %v1112 = vpack.c.b16 %v1108, %v1107
        %vm1113 = vsmask.f32 4352
        %v1115 = vshrl.u32 %v1109, 16
        %v1117 = vrot.slane %v1115, 3
        %v1118 = vshll.u32 %v1109, 16
        %v1120 = vrot.slane %v1118, 4
        %v1121 = vor.u32 %v1117, %v1120
        %v1123 = vshrl.u32 %v1110, 16
        %v1125 = vrot.slane %v1123, 3
        %v1126 = vshll.u32 %v1110, 16
        %v1128 = vrot.slane %v1126, 4
        %v1129 = vor.u32 %v1125, %v1128
        %v1130 = vsel %vm1113, %v1121, %v1129
        %v1132 = vshrl.u32 %v1111, 16
        %v1134 = vrot.slane %v1132, 3
        %v1135 = vshll.u32 %v1111, 16
        %v1137 = vrot.slane %v1135, 4
        %v1138 = vor.u32 %v1134, %v1137
        %v1139 = vsel %vm1113, %v1129, %v1138
        %v1141 = vshrl.u32 %v1112, 16
        %v1143 = vrot.slane %v1141, 3
        %v1144 = vshll.u32 %v1112, 16
        %v1146 = vrot.slane %v1144, 4
        %v1147 = vor.u32 %v1143, %v1146
        %v1148 = vsel %vm1113, %v1138, %v1147
        %vm1149 = vcmp.ne.s16.totalorder %v1121, 0
        %vm1150 = vcmp.ne.s16.totalorder %v1130, 0
        %vm1151 = vcmp.ne.s16.totalorder %v1139, 0
        %vm1152 = vcmp.ne.s16.totalorder %v1148, 0
        %vm1153 = vcmp.ne.s16.totalorder %v1147, 0
        %v1154 = vsel %vm1149, %v1067, 0
        %v1155 = vsel %vm1150, %v973, 0
        %v1156 = vsel %vm1151, %v974, 0
        %v1157 = vsel %vm1152, %v975, 0
        %v1158 = vsel %vm1153, %v1068, 0
        %v1159 = vld [vmem:[#allocation2] sm:$0x80]
        %v1160 = vld [vmem:[#allocation2 + $0x20] sm:$0xff]
        %vm1161 = vsmask.f32 7424
        %v1162 = vrot.slane %v1026, 1
        %v1163 = vor.u32 %v1023, %v1162
        %v1164 = vrot.slane %v1034, 1
        %v1165 = vsel %vm1161, %v1163, %v1164
        %v1166 = vor.u32 %v1031, %v1164
        %v1167 = vrot.slane %v1043, 1
        %v1168 = vsel %vm1161, %v1166, %v1167
        %v1169 = vor.u32 %v1040, %v1167
        %v1170 = vrot.slane %v1052, 1
        %v1171 = vsel %vm1161, %v1169, %v1170
        %v1172 = vor.u32 %v1049, %v1170
        %vm1173 = vcmp.ne.s16.totalorder %v1162, 0
        %vm1174 = vcmp.ne.s16.totalorder %v1165, 0
        %vm1175 = vcmp.ne.s16.totalorder %v1168, 0
        %vm1176 = vcmp.ne.s16.totalorder %v1171, 0
        %vm1177 = vcmp.ne.s16.totalorder %v1172, 0
        %v1178 = vsel %vm1173, %v1159, 0
        %v1179 = vsel %vm1174, %v973, 0
        %v1180 = vsel %vm1175, %v974, 0
        %v1181 = vsel %vm1176, %v975, 0
        %v1182 = vsel %vm1177, %v1160, 0
        %v1183 = vld [vmem:[#allocation2 + $0x8] sm:$0xff]
        %v1184 = vld [vmem:[#allocation2 + $0x10] sm:$0xff]
        %v1185 = vld [vmem:[#allocation2 + $0x18] sm:$0xff]
        %v1186 = vld [vmem:[#allocation2 + $0x20] sm:$0xff]
        %v1187 = vld [vmem:[#allocation2 + $0x28] sm:$0x1]
        %vm1188 = vsmask.f32 256
        %v1189 = vrot.slane %v1115, 7
        %v1190 = vor.u32 %v1189, %v1118
        %v1191 = vrot.slane %v1123, 7
        %v1192 = vor.u32 %v1191, %v1126
        %v1193 = vsel %vm1188, %v1189, %v1192
        %v1194 = vrot.slane %v1132, 7
        %v1195 = vor.u32 %v1194, %v1135
        %v1196 = vsel %vm1188, %v1191, %v1195
        %v1197 = vrot.slane %v1141, 7
        %v1198 = vor.u32 %v1197, %v1144
        %v1199 = vsel %vm1188, %v1194, %v1198
        %vm1200 = vcmp.ne.s16.totalorder %v1190, 0
        %vm1201 = vcmp.ne.s16.totalorder %v1193, 0
        %vm1202 = vcmp.ne.s16.totalorder %v1196, 0
        %vm1203 = vcmp.ne.s16.totalorder %v1199, 0
        %vm1204 = vcmp.ne.s16.totalorder %v1197, 0
        %v1205 = vsel %vm1200, %v1183, 0
        %v1206 = vsel %vm1201, %v1184, 0
        %v1207 = vsel %vm1202, %v1185, 0
        %v1208 = vsel %vm1203, %v1186, 0
        %v1209 = vsel %vm1204, %v1187, 0
        %v1210 = vld [vmem:[#allocation2 + $0x8] sm:$0xf8]
        %v1211 = vld [vmem:[#allocation2 + $0x28] sm:$0xf]
        %v1212 = vsel %vm1057, %v1210, 0
        %v1213 = vsel %vm1058, %v1184, 0
        %v1214 = vsel %vm1059, %v1185, 0
        %v1215 = vsel %vm1060, %v1186, 0
        %v1216 = vsel %vm1061, %v1211, 0
        %v1217 = vld [vmem:[#allocation2 + $0x8] sm:$0xf0]
        %v1218 = vld [vmem:[#allocation2 + $0x28] sm:$0x1f]
        %v1219 = vsel %vm1149, %v1217, 0
        %v1220 = vsel %vm1150, %v1184, 0
        %v1221 = vsel %vm1151, %v1185, 0
        %v1222 = vsel %vm1152, %v1186, 0
        %v1223 = vsel %vm1153, %v1218, 0
        %v1225 = vshrl.u32 %v1067, 16
        %v1227 = vshll.u32 %v1067, 16
        %v1229 = vrot.slane %v1227, 1
        %v1230 = vor.u32 %v1225, %v1229
        %v1232 = vshll.u32 %v973, 16
        %v1234 = vrot.slane %v1232, 1
        %v1235 = vsel %vm1161, %v1230, %v1234
        %v1236 = vshrl.u32 %v973, 16
        %v1238 = vor.u32 %v1236, %v1234
        %v1240 = vshll.u32 %v974, 16
        %v1242 = vrot.slane %v1240, 1
        %v1243 = vsel %vm1161, %v1238, %v1242
        %v1244 = vshrl.u32 %v974, 16
        %v1246 = vor.u32 %v1244, %v1242
        %v1248 = vshll.u32 %v975, 16
        %v1250 = vrot.slane %v1248, 1
        %v1251 = vsel %vm1161, %v1246, %v1250
        %v1252 = vshrl.u32 %v975, 16
        %v1254 = vor.u32 %v1252, %v1250
        %v1256 = vshll.u32 %v976, 16
        %v1258 = vrot.slane %v1256, 1
        %v1259 = vsel %vm1161, %v1254, %v1258
        %v1260 = vshrl.u32 %v976, 16
        %v1262 = vor.u32 %v1260, %v1258
        %vm1268 = vcmask 1046528
        %v1269 = vrot.slane %v1154, 1
        %v1270 = vrot.slane %v1155, 1
        %v1271 = vsel %vm1268, %v1269, %v1270
        %v1272 = vrot.slane %v1156, 1
        %v1273 = vsel %vm1268, %v1270, %v1272
        %v1274 = vrot.slane %v1157, 1
        %v1275 = vsel %vm1268, %v1272, %v1274
        %v1276 = vrot.slane %v1158, 1
        %v1277 = vsel %vm1268, %v1274, %v1276
        %vm1283 = vcmask 1043456
        %v1284 = vrot.slane %v1178, 4
        %v1285 = vrot.slane %v1179, 4
        %v1286 = vsel %vm1283, %v1284, %v1285
        %v1287 = vrot.slane %v1180, 4
        %v1288 = vsel %vm1283, %v1285, %v1287
        %v1289 = vrot.slane %v1181, 4
        %v1290 = vsel %vm1283, %v1287, %v1289
        %v1291 = vrot.slane %v1182, 4
        %v1292 = vsel %vm1283, %v1289, %v1291
        %v1293 = vrot.slane %v1236, 4
        %v1294 = vrot.slane %v1232, 5
        %v1295 = vor.u32 %v1293, %v1294
        %v1296 = vrot.slane %v1244, 4
        %v1297 = vrot.slane %v1240, 5
        %v1298 = vor.u32 %v1296, %v1297
        %v1299 = vsel %vm1021, %v1295, %v1298
        %v1300 = vrot.slane %v1252, 4
        %v1301 = vrot.slane %v1248, 5
        %v1302 = vor.u32 %v1300, %v1301
        %v1303 = vsel %vm1021, %v1298, %v1302
        %v1305 = vshrl.u32 %v1160, 16
        %v1307 = vrot.slane %v1305, 4
        %v1308 = vshll.u32 %v1160, 16
        %v1310 = vrot.slane %v1308, 5
        %v1311 = vor.u32 %v1307, %v1310
        %v1312 = vsel %vm1021, %v1302, %v1311
        %vm1318 = vcmask 1042432
        %v1319 = vrot.slane %v1205, 5
        %v1320 = vrot.slane %v1206, 5
        %v1321 = vsel %vm1318, %v1319, %v1320
        %v1322 = vrot.slane %v1207, 5
        %v1323 = vsel %vm1318, %v1320, %v1322
        %v1324 = vrot.slane %v1208, 5
        %v1325 = vsel %vm1318, %v1322, %v1324
        %v1326 = vrot.slane %v1209, 5
        %v1327 = vsel %vm1318, %v1324, %v1326
        %v1329 = vshrl.u32 %v1217, 16
        %v1331 = vshll.u32 %v1217, 16
        %v1333 = vrot.slane %v1331, 1
        %v1334 = vor.u32 %v1329, %v1333
        %v1336 = vshll.u32 %v1184, 16
        %v1338 = vrot.slane %v1336, 1
        %v1339 = vsel %vm1161, %v1334, %v1338
        %v1340 = vshrl.u32 %v1184, 16
        %v1342 = vor.u32 %v1340, %v1338
        %v1344 = vshll.u32 %v1185, 16
        %v1346 = vrot.slane %v1344, 1
        %v1347 = vsel %vm1161, %v1342, %v1346
        %v1348 = vshrl.u32 %v1185, 16
        %v1350 = vor.u32 %v1348, %v1346
        %v1352 = vshll.u32 %v1186, 16
        %v1354 = vrot.slane %v1352, 1
        %v1355 = vsel %vm1161, %v1350, %v1354
        %v1356 = vshrl.u32 %v1186, 16
        %v1358 = vor.u32 %v1356, %v1354
        %v1360 = vshll.u32 %v1211, 16
        %v1362 = vrot.slane %v1360, 1
        %v1363 = vsel %vm1161, %v1358, %v1362
        %v1364 = vshrl.u32 %v1211, 16
        %v1366 = vor.u32 %v1364, %v1362
        %v1372 = vrot.slane %v1219, 1
        %v1373 = vrot.slane %v1220, 1
        %v1374 = vsel %vm1268, %v1372, %v1373
        %v1375 = vrot.slane %v1221, 1
        %v1376 = vsel %vm1268, %v1373, %v1375
        %v1377 = vrot.slane %v1222, 1
        %v1378 = vsel %vm1268, %v1375, %v1377
        %v1379 = vrot.slane %v1223, 1
        %v1380 = vsel %vm1268, %v1377, %v1379
        %v1381 = vld [vmem:[#allocation8] sm:$0xf]
        %v1382 = vld [vmem:[#allocation8 + $0x4] sm:$0xf]
        %v1383 = vld [vmem:[#allocation8 + $0x8] sm:$0xf]
        %v1384 = vld [vmem:[#allocation8 + $0xc] sm:$0xf]
        %v1385 = vld [vmem:[#allocation8 + $0x10] sm:$0xf]
        %v1386 = vld [vmem:[#allocation8 + $0x14] sm:$0xf]
        %v1387 = vld [vmem:[#allocation8 + $0x18] sm:$0xf]
        %v1388 = vld [vmem:[#allocation8 + $0x1c] sm:$0xf]
        %v1389 = vld [vmem:[#allocation8 + $0x20] sm:$0xf]
        %v1390 = vld [vmem:[#allocation8 + $0x24] sm:$0xf]
        %v1391 = vld [vmem:[#allocation8 + $0x28] sm:$0xf]
        %v1392 = vld [vmem:[#allocation8 + $0x2c] sm:$0xf]
        %v1393 = vld [vmem:[#allocation8 + $0x30] sm:$0xf]
        %v1394 = vld [vmem:[#allocation8 + $0x34] sm:$0xf]
        %v1395 = vld [vmem:[#allocation8 + $0x38] sm:$0xf]
        %v1396 = vld [vmem:[#allocation8 + $0x3c] sm:$0xf]
        %v1397 = vld [vmem:[#allocation8 + $0x40] sm:$0xf]
        %v1398 = vld [vmem:[#allocation8 + $0x44] sm:$0xf]
        %v1399 = vld [vmem:[#allocation8 + $0x48] sm:$0xf]
        %v1400 = vld [vmem:[#allocation8 + $0x4c] sm:$0xf]
        %v1401 = vld [vmem:[#allocation8 + $0x50] sm:$0xf]
        %v1402 = vld [vmem:[#allocation8 + $0x54] sm:$0xf]
        %v1403 = vld [vmem:[#allocation8 + $0x58] sm:$0xf]
        %v1404 = vld [vmem:[#allocation8 + $0x5c] sm:$0xf]
        %v1405 = vld [vmem:[#allocation8 + $0x60] sm:$0xf]
        %v1406 = vld [vmem:[#allocation8 + $0x64] sm:$0xf]
        %v1407 = vld [vmem:[#allocation8 + $0x68] sm:$0xf]
        %v1408 = vld [vmem:[#allocation8 + $0x6c] sm:$0xf]
        %v1409 = vld [vmem:[#allocation8 + $0x70] sm:$0xf]
        %v1410 = vld [vmem:[#allocation8 + $0x74] sm:$0xf]
        %v1411 = vld [vmem:[#allocation8 + $0x78] sm:$0xf]
        %v1412 = vld [vmem:[#allocation8 + $0x7c] sm:$0xf]
        %v1413 = vld [vmem:[#allocation8 + $0x80] sm:$0xf]
        %v1414 = vld [vmem:[#allocation8 + $0x84] sm:$0xf]
        %v1415 = vld [vmem:[#allocation8 + $0x88] sm:$0xf]
        %v1416 = vld [vmem:[#allocation8 + $0x8c] sm:$0xf]
        %v1417 = vld [vmem:[#allocation8 + $0x90] sm:$0xf]
        %v1418 = vld [vmem:[#allocation8 + $0x94] sm:$0xf]
        %v1419 = vld [vmem:[#allocation8 + $0x98] sm:$0xf]
        %v1420 = vld [vmem:[#allocation8 + $0x9c] sm:$0xf]
        %v1421 = vld [vmem:[#allocation8 + $0xa0] sm:$0xf]
        %v1422 = vld [vmem:[#allocation8 + $0xa4] sm:$0xf]
        %v1423 = vld [vmem:[#allocation8 + $0xa8] sm:$0xf]
        %v1424 = vld [vmem:[#allocation8 + $0xac] sm:$0xf]
        %v1425 = vld [vmem:[#allocation8 + $0xb0] sm:$0xf]
        %v1426 = vld [vmem:[#allocation8 + $0xb4] sm:$0xf]
        %v1427 = vld [vmem:[#allocation8 + $0xb8] sm:$0xf]
        %v1428 = vld [vmem:[#allocation8 + $0xbc] sm:$0xf]
        %v1429 = vld [vmem:[#allocation8 + $0xc0] sm:$0xf]
        %v1430 = vld [vmem:[#allocation8 + $0xc4] sm:$0xf]
        %v1431 = vld [vmem:[#allocation8 + $0xc8] sm:$0xf]
        %v1432 = vld [vmem:[#allocation8 + $0xcc] sm:$0xf]
        %v1433 = vld [vmem:[#allocation8 + $0xd0] sm:$0xf]
        %v1434 = vld [vmem:[#allocation8 + $0xd4] sm:$0xf]
        %v1435 = vld [vmem:[#allocation8 + $0xd8] sm:$0xf]
        %v1436 = vld [vmem:[#allocation8 + $0xdc] sm:$0xf]
        %v1437 = vld [vmem:[#allocation8 + $0xe0] sm:$0xf]
        %v1438 = vld [vmem:[#allocation8 + $0xe4] sm:$0xf]
        %v1439 = vld [vmem:[#allocation8 + $0xe8] sm:$0xf]
        %v1440 = vld [vmem:[#allocation8 + $0xec] sm:$0xf]
        %v1441 = vld [vmem:[#allocation8 + $0xf0] sm:$0xf]
        %v1442 = vld [vmem:[#allocation8 + $0xf4] sm:$0xf]
        %v1443 = vld [vmem:[#allocation8 + $0xf8] sm:$0xf]
        %v1444 = vld [vmem:[#allocation8 + $0xfc] sm:$0xf]
        %v1445 = vld [vmem:[#allocation8 + $0x100] sm:$0xf]
        %v1446 = vld [vmem:[#allocation8 + $0x104] sm:$0xf]
        %v1447 = vld [vmem:[#allocation8 + $0x108] sm:$0xf]
        %v1448 = vld [vmem:[#allocation8 + $0x10c] sm:$0xf]
        %v1449 = vld [vmem:[#allocation8 + $0x110] sm:$0xf]
        %v1450 = vld [vmem:[#allocation8 + $0x114] sm:$0xf]
        %v1451 = vld [vmem:[#allocation8 + $0x118] sm:$0xf]
        %v1452 = vld [vmem:[#allocation8 + $0x11c] sm:$0xf]
        %v1453 = vld [vmem:[#allocation8 + $0x120] sm:$0xf]
        %v1454 = vld [vmem:[#allocation8 + $0x124] sm:$0xf]
        %v1455 = vld [vmem:[#allocation8 + $0x128] sm:$0xf]
        %v1456 = vld [vmem:[#allocation8 + $0x12c] sm:$0xf]
        %v1457 = vld [vmem:[#allocation8 + $0x130] sm:$0xf]
        %v1458 = vld [vmem:[#allocation8 + $0x134] sm:$0xf]
        %v1459 = vld [vmem:[#allocation8 + $0x138] sm:$0xf]
        %v1460 = vld [vmem:[#allocation8 + $0x13c] sm:$0xf]
        %v1461 = vld [vmem:[#allocation8 + $0x140] sm:$0xf]
        %v1462 = vld [vmem:[#allocation8 + $0x144] sm:$0xf]
        %v1463 = vld [vmem:[#allocation8 + $0x148] sm:$0xf]
        %v1464 = vld [vmem:[#allocation8 + $0x14c] sm:$0xf]
        %v1465 = vld [vmem:[#allocation8 + $0x150] sm:$0xf]
        %v1466 = vld [vmem:[#allocation8 + $0x154] sm:$0xf]
        %v1467 = vld [vmem:[#allocation8 + $0x158] sm:$0xf]
        %v1468 = vld [vmem:[#allocation8 + $0x15c] sm:$0xf]
        %v1469 = vld [vmem:[#allocation8 + $0x160] sm:$0xf]
        %v1470 = vld [vmem:[#allocation8 + $0x164] sm:$0xf]
        %v1471 = vld [vmem:[#allocation8 + $0x168] sm:$0xf]
        %v1472 = vld [vmem:[#allocation8 + $0x16c] sm:$0xf]
        %v1473 = vld [vmem:[#allocation8 + $0x170] sm:$0xf]
        %v1474 = vld [vmem:[#allocation8 + $0x174] sm:$0xf]
        %v1475 = vld [vmem:[#allocation8 + $0x178] sm:$0xf]
        %v1476 = vld [vmem:[#allocation8 + $0x17c] sm:$0xf]
        %v1477 = vld [vmem:[#allocation8 + $0x180] sm:$0xf]
        %v1478 = vld [vmem:[#allocation8 + $0x184] sm:$0xf]
        %v1479 = vld [vmem:[#allocation8 + $0x188] sm:$0xf]
        %v1480 = vld [vmem:[#allocation8 + $0x18c] sm:$0xf]
        %v1481 = vld [vmem:[#allocation8 + $0x190] sm:$0xf]
        %v1482 = vld [vmem:[#allocation8 + $0x194] sm:$0xf]
        %v1483 = vld [vmem:[#allocation8 + $0x198] sm:$0xf]
        %v1484 = vld [vmem:[#allocation8 + $0x19c] sm:$0xf]
        %v1485 = vld [vmem:[#allocation8 + $0x1a0] sm:$0xf]
        %v1486 = vld [vmem:[#allocation8 + $0x1a4] sm:$0xf]
        %v1487 = vld [vmem:[#allocation8 + $0x1a8] sm:$0xf]
        %v1488 = vld [vmem:[#allocation8 + $0x1ac] sm:$0xf]
        %v1489 = vld [vmem:[#allocation8 + $0x1b0] sm:$0xf]
        %v1490 = vld [vmem:[#allocation8 + $0x1b4] sm:$0xf]
        %v1491 = vld [vmem:[#allocation8 + $0x1b8] sm:$0xf]
        %v1492 = vld [vmem:[#allocation8 + $0x1bc] sm:$0xf]
        %v1493 = vld [vmem:[#allocation8 + $0x1c0] sm:$0xf]
        %v1494 = vld [vmem:[#allocation8 + $0x1c4] sm:$0xf]
        %v1495 = vld [vmem:[#allocation8 + $0x1c8] sm:$0xf]
        %v1496 = vld [vmem:[#allocation8 + $0x1cc] sm:$0xf]
        %v1497 = vld [vmem:[#allocation8 + $0x1d0] sm:$0xf]
        %v1498 = vld [vmem:[#allocation8 + $0x1d4] sm:$0xf]
        %v1499 = vld [vmem:[#allocation8 + $0x1d8] sm:$0xf]
        %v1500 = vld [vmem:[#allocation8 + $0x1dc] sm:$0xf]
        %v1501 = vld [vmem:[#allocation8 + $0x1e0] sm:$0xf]
        %v1502 = vld [vmem:[#allocation8 + $0x1e4] sm:$0xf]
        %v1503 = vld [vmem:[#allocation8 + $0x1e8] sm:$0xf]
        %v1504 = vld [vmem:[#allocation8 + $0x1ec] sm:$0xf]
        %v1505 = vld [vmem:[#allocation8 + $0x1f0] sm:$0xf]
        %v1506 = vld [vmem:[#allocation8 + $0x1f4] sm:$0xf]
        %v1507 = vld [vmem:[#allocation8 + $0x1f8] sm:$0xf]
        %v1508 = vld [vmem:[#allocation8 + $0x1fc] sm:$0xf]
        %v1509 = vld [vmem:[#allocation8 + $0x200] sm:$0xf]
        %v1510 = vld [vmem:[#allocation8 + $0x204] sm:$0xf]
        %v1511 = vld [vmem:[#allocation8 + $0x208] sm:$0xf]
        %v1512 = vld [vmem:[#allocation8 + $0x20c] sm:$0xf]
        %v1513 = vld [vmem:[#allocation8 + $0x210] sm:$0xf]
        %v1514 = vld [vmem:[#allocation8 + $0x214] sm:$0xf]
        %v1515 = vld [vmem:[#allocation8 + $0x218] sm:$0xf]
        %v1516 = vld [vmem:[#allocation8 + $0x21c] sm:$0xf]
        %v1517 = vld [vmem:[#allocation8 + $0x220] sm:$0xf]
        %v1518 = vld [vmem:[#allocation8 + $0x224] sm:$0xf]
        %v1519 = vld [vmem:[#allocation8 + $0x228] sm:$0xf]
        %v1520 = vld [vmem:[#allocation8 + $0x22c] sm:$0xf]
        %v1521 = vld [vmem:[#allocation8 + $0x230] sm:$0xf]
        %v1522 = vld [vmem:[#allocation8 + $0x234] sm:$0xf]
        %v1523 = vld [vmem:[#allocation8 + $0x238] sm:$0xf]
        %v1524 = vld [vmem:[#allocation8 + $0x23c] sm:$0xf]
        %v1525 = vld [vmem:[%s4] sm:$0x1]
        %v1527 = vlaneseq
        %v1528 = vshrl.u32 %v1527, 7
        %v1529 = vsub.s32 0, %v1528
        %v1530 = vrot.slane %v1525, %v1529
        %v1533 = vshrl.u32 %v1062, 16
        %v1535 = vrot.slane %v1533, 3
        %v1536 = vshll.u32 %v1062, 16
        %v1538 = vrot.slane %v1536, 4
        %v1539 = vor.u32 %v1535, %v1538
        %v1541 = vshrl.u32 %v1063, 16
        %v1543 = vrot.slane %v1541, 3
        %v1544 = vshll.u32 %v1063, 16
        %v1546 = vrot.slane %v1544, 4
        %v1547 = vor.u32 %v1543, %v1546
        %v1548 = vsel %vm1113, %v1539, %v1547
        %v1550 = vshrl.u32 %v1235, 16
        %v1552 = vrot.slane %v1550, 3
        %v1553 = vshll.u32 %v1235, 16
        %v1555 = vrot.slane %v1553, 4
        %v1556 = vor.u32 %v1552, %v1555
        %v1558 = vshrl.u32 %v1243, 16
        %v1560 = vrot.slane %v1558, 3
        %v1561 = vshll.u32 %v1243, 16
        %v1563 = vrot.slane %v1561, 4
        %v1564 = vor.u32 %v1560, %v1563
        %v1565 = vsel %vm1113, %v1556, %v1564
        %v1567 = vshrl.u32 %v1271, 16
        %v1569 = vrot.slane %v1567, 3
        %v1570 = vshll.u32 %v1271, 16
        %v1572 = vrot.slane %v1570, 4
        %v1573 = vor.u32 %v1569, %v1572
        %v1575 = vshrl.u32 %v1273, 16
        %v1577 = vrot.slane %v1575, 3
        %v1578 = vshll.u32 %v1273, 16
        %v1580 = vrot.slane %v1578, 4
        %v1581 = vor.u32 %v1577, %v1580
        %v1582 = vsel %vm1113, %v1573, %v1581
        %v1584 = vshrl.u32 %v1286, 16
        %v1586 = vrot.slane %v1584, 3
        %v1587 = vshll.u32 %v1286, 16
        %v1589 = vrot.slane %v1587, 4
        %v1590 = vor.u32 %v1586, %v1589
        %v1592 = vshrl.u32 %v1288, 16
        %v1594 = vrot.slane %v1592, 3
        %v1595 = vshll.u32 %v1288, 16
        %v1597 = vrot.slane %v1595, 4
        %v1598 = vor.u32 %v1594, %v1597
        %v1599 = vsel %vm1113, %v1590, %v1598
        %v1601 = vshrl.u32 %v1295, 16
        %v1603 = vrot.slane %v1601, 3
        %v1604 = vshll.u32 %v1295, 16
        %v1606 = vrot.slane %v1604, 4
        %v1607 = vor.u32 %v1603, %v1606
        %v1609 = vshrl.u32 %v1299, 16
        %v1611 = vrot.slane %v1609, 3
        %v1612 = vshll.u32 %v1299, 16
        %v1614 = vrot.slane %v1612, 4
        %v1615 = vor.u32 %v1611, %v1614
        %v1616 = vsel %vm1113, %v1607, %v1615
        %v1618 = vshrl.u32 %v1319, 16
        %v1620 = vrot.slane %v1618, 3
        %v1621 = vshll.u32 %v1319, 16
        %v1623 = vrot.slane %v1621, 4
        %v1624 = vor.u32 %v1620, %v1623
        %v1626 = vshrl.u32 %v1321, 16
        %v1628 = vrot.slane %v1626, 3
        %v1629 = vshll.u32 %v1321, 16
        %v1631 = vrot.slane %v1629, 4
        %v1632 = vor.u32 %v1628, %v1631
        %v1633 = vsel %vm1113, %v1624, %v1632
        %v1635 = vshrl.u32 %v1212, 16
        %v1637 = vrot.slane %v1635, 3
        %v1638 = vshll.u32 %v1212, 16
        %v1640 = vrot.slane %v1638, 4
        %v1641 = vor.u32 %v1637, %v1640
        %v1643 = vshrl.u32 %v1213, 16
        %v1645 = vrot.slane %v1643, 3
        %v1646 = vshll.u32 %v1213, 16
        %v1648 = vrot.slane %v1646, 4
        %v1649 = vor.u32 %v1645, %v1648
        %v1650 = vsel %vm1113, %v1641, %v1649
        %v1652 = vshrl.u32 %v1339, 16
        %v1654 = vrot.slane %v1652, 3
        %v1655 = vshll.u32 %v1339, 16
        %v1657 = vrot.slane %v1655, 4
        %v1658 = vor.u32 %v1654, %v1657
        %v1660 = vshrl.u32 %v1347, 16
        %v1662 = vrot.slane %v1660, 3
        %v1663 = vshll.u32 %v1347, 16
        %v1665 = vrot.slane %v1663, 4
        %v1666 = vor.u32 %v1662, %v1665
        %v1667 = vsel %vm1113, %v1658, %v1666
        %v1669 = vshrl.u32 %v1374, 16
        %v1671 = vrot.slane %v1669, 3
        %v1672 = vshll.u32 %v1374, 16
        %v1674 = vrot.slane %v1672, 4
        %v1675 = vor.u32 %v1671, %v1674
        %v1677 = vshrl.u32 %v1376, 16
        %v1679 = vrot.slane %v1677, 3
        %v1680 = vshll.u32 %v1376, 16
        %v1682 = vrot.slane %v1680, 4
        %v1683 = vor.u32 %v1679, %v1682
        %v1684 = vsel %vm1113, %v1675, %v1683
        %v1686 = vshrl.u32 %v1064, 16
        %v1688 = vrot.slane %v1686, 3
        %v1689 = vshll.u32 %v1064, 16
        %v1691 = vrot.slane %v1689, 4
        %v1692 = vor.u32 %v1688, %v1691
        %v1693 = vsel %vm1113, %v1547, %v1692
        %v1695 = vshrl.u32 %v1251, 16
        %v1697 = vrot.slane %v1695, 3
        %v1698 = vshll.u32 %v1251, 16
        %v1700 = vrot.slane %v1698, 4
        %v1701 = vor.u32 %v1697, %v1700
        %v1702 = vsel %vm1113, %v1564, %v1701
        %v1704 = vshrl.u32 %v1275, 16
        %v1706 = vrot.slane %v1704, 3
        %v1707 = vshll.u32 %v1275, 16
        %v1709 = vrot.slane %v1707, 4
        %v1710 = vor.u32 %v1706, %v1709
        %v1711 = vsel %vm1113, %v1581, %v1710
        %v1713 = vshrl.u32 %v1290, 16
        %v1715 = vrot.slane %v1713, 3
        %v1716 = vshll.u32 %v1290, 16
        %v1718 = vrot.slane %v1716, 4
        %v1719 = vor.u32 %v1715, %v1718
        %v1720 = vsel %vm1113, %v1598, %v1719
        %v1722 = vshrl.u32 %v1303, 16
        %v1724 = vrot.slane %v1722, 3
        %v1725 = vshll.u32 %v1303, 16
        %v1727 = vrot.slane %v1725, 4
        %v1728 = vor.u32 %v1724, %v1727
        %v1729 = vsel %vm1113, %v1615, %v1728
        %v1731 = vshrl.u32 %v1323, 16
        %v1733 = vrot.slane %v1731, 3
        %v1734 = vshll.u32 %v1323, 16
        %v1736 = vrot.slane %v1734, 4
        %v1737 = vor.u32 %v1733, %v1736
        %v1738 = vsel %vm1113, %v1632, %v1737
        %v1740 = vshrl.u32 %v1214, 16
        %v1742 = vrot.slane %v1740, 3
        %v1743 = vshll.u32 %v1214, 16
        %v1745 = vrot.slane %v1743, 4
        %v1746 = vor.u32 %v1742, %v1745
        %v1747 = vsel %vm1113, %v1649, %v1746
        %v1749 = vshrl.u32 %v1355, 16
        %v1751 = vrot.slane %v1749, 3
        %v1752 = vshll.u32 %v1355, 16
        %v1754 = vrot.slane %v1752, 4
        %v1755 = vor.u32 %v1751, %v1754
        %v1756 = vsel %vm1113, %v1666, %v1755
        %v1758 = vshrl.u32 %v1378, 16
        %v1760 = vrot.slane %v1758, 3
        %v1761 = vshll.u32 %v1378, 16
        %v1763 = vrot.slane %v1761, 4
        %v1764 = vor.u32 %v1760, %v1763
        %v1765 = vsel %vm1113, %v1683, %v1764
        %v1767 = vshrl.u32 %v1065, 16
        %v1769 = vrot.slane %v1767, 3
        %v1770 = vshll.u32 %v1065, 16
        %v1772 = vrot.slane %v1770, 4
        %v1773 = vor.u32 %v1769, %v1772
        %v1774 = vsel %vm1113, %v1692, %v1773
        %v1776 = vshrl.u32 %v1259, 16
        %v1778 = vrot.slane %v1776, 3
        %v1779 = vshll.u32 %v1259, 16
        %v1781 = vrot.slane %v1779, 4
        %v1782 = vor.u32 %v1778, %v1781
        %v1783 = vsel %vm1113, %v1701, %v1782
        %v1785 = vshrl.u32 %v1277, 16
        %v1787 = vrot.slane %v1785, 3
        %v1788 = vshll.u32 %v1277, 16
        %v1790 = vrot.slane %v1788, 4
        %v1791 = vor.u32 %v1787, %v1790
        %v1792 = vsel %vm1113, %v1710, %v1791
        %v1794 = vshrl.u32 %v1292, 16
        %v1796 = vrot.slane %v1794, 3
        %v1797 = vshll.u32 %v1292, 16
        %v1799 = vrot.slane %v1797, 4
        %v1800 = vor.u32 %v1796, %v1799
        %v1801 = vsel %vm1113, %v1719, %v1800
        %v1803 = vshrl.u32 %v1312, 16
        %v1805 = vrot.slane %v1803, 3
        %v1806 = vshll.u32 %v1312, 16
        %v1808 = vrot.slane %v1806, 4
        %v1809 = vor.u32 %v1805, %v1808
        %v1810 = vsel %vm1113, %v1728, %v1809
        %v1812 = vshrl.u32 %v1325, 16
        %v1814 = vrot.slane %v1812, 3
        %v1815 = vshll.u32 %v1325, 16
        %v1817 = vrot.slane %v1815, 4
        %v1818 = vor.u32 %v1814, %v1817
        %v1819 = vsel %vm1113, %v1737, %v1818
        %v1821 = vshrl.u32 %v1215, 16
        %v1823 = vrot.slane %v1821, 3
        %v1824 = vshll.u32 %v1215, 16
        %v1826 = vrot.slane %v1824, 4
        %v1827 = vor.u32 %v1823, %v1826
        %v1828 = vsel %vm1113, %v1746, %v1827
        %v1830 = vshrl.u32 %v1363, 16
        %v1832 = vrot.slane %v1830, 3
        %v1833 = vshll.u32 %v1363, 16
        %v1835 = vrot.slane %v1833, 4
        %v1836 = vor.u32 %v1832, %v1835
        %v1837 = vsel %vm1113, %v1755, %v1836
        %v1839 = vshrl.u32 %v1380, 16
        %v1841 = vrot.slane %v1839, 3
        %v1842 = vshll.u32 %v1380, 16
        %v1844 = vrot.slane %v1842, 4
        %v1845 = vor.u32 %v1841, %v1844
        %v1846 = vsel %vm1113, %v1764, %v1845
        %v1848 = vshrl.u32 %v1066, 16
        %v1850 = vrot.slane %v1848, 3
        %v1851 = vshll.u32 %v1066, 16
        %v1853 = vrot.slane %v1851, 4
        %v1854 = vor.u32 %v1850, %v1853
        %v1855 = vsel %vm1113, %v1773, %v1854
        %v1857 = vshrl.u32 %v1262, 16
        %v1859 = vrot.slane %v1857, 3
        %v1860 = vshll.u32 %v1262, 16
        %v1862 = vrot.slane %v1860, 4
        %v1863 = vor.u32 %v1859, %v1862
        %v1864 = vsel %vm1113, %v1782, %v1863
        %v1866 = vshrl.u32 %v1276, 16
        %v1868 = vrot.slane %v1866, 3
        %v1869 = vshll.u32 %v1276, 16
        %v1871 = vrot.slane %v1869, 4
        %v1872 = vor.u32 %v1868, %v1871
        %v1873 = vsel %vm1113, %v1791, %v1872
        %v1875 = vshrl.u32 %v1291, 16
        %v1877 = vrot.slane %v1875, 3
        %v1878 = vshll.u32 %v1291, 16
        %v1880 = vrot.slane %v1878, 4
        %v1881 = vor.u32 %v1877, %v1880
        %v1882 = vsel %vm1113, %v1800, %v1881
        %v1884 = vshrl.u32 %v1311, 16
        %v1886 = vrot.slane %v1884, 3
        %v1887 = vshll.u32 %v1311, 16
        %v1889 = vrot.slane %v1887, 4
        %v1890 = vor.u32 %v1886, %v1889
        %v1891 = vsel %vm1113, %v1809, %v1890
        %v1893 = vshrl.u32 %v1327, 16
        %v1895 = vrot.slane %v1893, 3
        %v1896 = vshll.u32 %v1327, 16
        %v1898 = vrot.slane %v1896, 4
        %v1899 = vor.u32 %v1895, %v1898
        %v1900 = vsel %vm1113, %v1818, %v1899
        %v1902 = vshrl.u32 %v1216, 16
        %v1904 = vrot.slane %v1902, 3
        %v1905 = vshll.u32 %v1216, 16
        %v1907 = vrot.slane %v1905, 4
        %v1908 = vor.u32 %v1904, %v1907
        %v1909 = vsel %vm1113, %v1827, %v1908
        %v1911 = vshrl.u32 %v1366, 16
        %v1913 = vrot.slane %v1911, 3
        %v1914 = vshll.u32 %v1366, 16
        %v1916 = vrot.slane %v1914, 4
        %v1917 = vor.u32 %v1913, %v1916
        %v1918 = vsel %vm1113, %v1836, %v1917
        %v1920 = vshrl.u32 %v1379, 16
        %v1922 = vrot.slane %v1920, 3
        %v1923 = vshll.u32 %v1379, 16
        %v1925 = vrot.slane %v1923, 4
        %v1926 = vor.u32 %v1922, %v1925
        %v1927 = vsel %vm1113, %v1845, %v1926
        %v2108 = vunpack.c.l.b16 %v1381
        %v2109 = vunpack.c.l.b16 %v1382
        %v2110 = vunpack.c.l.b16 %v1383
        %v2111 = vunpack.c.l.b16 %v1384
        %v2112 = vunpack.c.l.b16 %v1385
        %v2113 = vunpack.c.l.b16 %v1386
        %v2114 = vunpack.c.l.b16 %v1387
        %v2115 = vunpack.c.l.b16 %v1388
        %v2116 = vunpack.c.l.b16 %v1389
        %v2117 = vunpack.c.l.b16 %v1390
        %v2118 = vunpack.c.l.b16 %v1391
        %v2119 = vunpack.c.l.b16 %v1392
        %v2120 = vunpack.c.l.b16 %v1393
        %v2121 = vunpack.c.l.b16 %v1394
        %v2122 = vunpack.c.l.b16 %v1395
        %v2123 = vunpack.c.l.b16 %v1396
        %v2124 = vunpack.c.l.b16 %v1397
        %v2125 = vunpack.c.l.b16 %v1398
        %v2126 = vunpack.c.l.b16 %v1399
        %v2127 = vunpack.c.l.b16 %v1400
        %v2128 = vunpack.c.l.b16 %v1401
        %v2129 = vunpack.c.l.b16 %v1402
        %v2130 = vunpack.c.l.b16 %v1403
        %v2131 = vunpack.c.l.b16 %v1404
        %v2132 = vunpack.c.l.b16 %v1405
        %v2133 = vunpack.c.l.b16 %v1406
        %v2134 = vunpack.c.l.b16 %v1407
        %v2135 = vunpack.c.l.b16 %v1408
        %v2136 = vunpack.c.l.b16 %v1409
        %v2137 = vunpack.c.l.b16 %v1410
        %v2138 = vunpack.c.l.b16 %v1411
        %v2139 = vunpack.c.l.b16 %v1412
        %v2140 = vunpack.c.l.b16 %v1413
        %v2141 = vunpack.c.l.b16 %v1414
        %v2142 = vunpack.c.l.b16 %v1415
        %v2143 = vunpack.c.l.b16 %v1416
        %v2144 = vunpack.c.l.b16 %v1417
        %v2145 = vunpack.c.l.b16 %v1418
        %v2146 = vunpack.c.l.b16 %v1419
        %v2147 = vunpack.c.l.b16 %v1420
        %v2148 = vunpack.c.l.b16 %v1421
        %v2149 = vunpack.c.l.b16 %v1422
        %v2150 = vunpack.c.l.b16 %v1423
        %v2151 = vunpack.c.l.b16 %v1424
        %v2152 = vunpack.c.l.b16 %v1425
        %v2153 = vunpack.c.l.b16 %v1426
        %v2154 = vunpack.c.l.b16 %v1427
        %v2155 = vunpack.c.l.b16 %v1428
        %v2156 = vunpack.c.l.b16 %v1429
        %v2157 = vunpack.c.l.b16 %v1430
        %v2158 = vunpack.c.l.b16 %v1431
        %v2159 = vunpack.c.l.b16 %v1432
        %v2160 = vunpack.c.l.b16 %v1433
        %v2161 = vunpack.c.l.b16 %v1434
        %v2162 = vunpack.c.l.b16 %v1435
        %v2163 = vunpack.c.l.b16 %v1436
        %v2164 = vunpack.c.l.b16 %v1437
        %v2165 = vunpack.c.l.b16 %v1438
        %v2166 = vunpack.c.l.b16 %v1439
        %v2167 = vunpack.c.l.b16 %v1440
        %v2168 = vunpack.c.l.b16 %v1441
        %v2169 = vunpack.c.l.b16 %v1442
        %v2170 = vunpack.c.l.b16 %v1443
        %v2171 = vunpack.c.l.b16 %v1444
        %v2172 = vunpack.c.l.b16 %v1445
        %v2173 = vunpack.c.l.b16 %v1446
        %v2174 = vunpack.c.l.b16 %v1447
        %v2175 = vunpack.c.l.b16 %v1448
        %v2176 = vunpack.c.l.b16 %v1449
        %v2177 = vunpack.c.l.b16 %v1450
        %v2178 = vunpack.c.l.b16 %v1451
        %v2179 = vunpack.c.l.b16 %v1452
        %v2180 = vunpack.c.l.b16 %v1453
        %v2181 = vunpack.c.l.b16 %v1454
        %v2182 = vunpack.c.l.b16 %v1455
        %v2183 = vunpack.c.l.b16 %v1456
        %v2184 = vunpack.c.l.b16 %v1457
        %v2185 = vunpack.c.l.b16 %v1458
        %v2186 = vunpack.c.l.b16 %v1459
        %v2187 = vunpack.c.l.b16 %v1460
        %v2188 = vunpack.c.l.b16 %v1461
        %v2189 = vunpack.c.l.b16 %v1462
        %v2190 = vunpack.c.l.b16 %v1463
        %v2191 = vunpack.c.l.b16 %v1464
        %v2192 = vunpack.c.l.b16 %v1465
        %v2193 = vunpack.c.l.b16 %v1466
        %v2194 = vunpack.c.l.b16 %v1467
        %v2195 = vunpack.c.l.b16 %v1468
        %v2196 = vunpack.c.l.b16 %v1469
        %v2197 = vunpack.c.l.b16 %v1470
        %v2198 = vunpack.c.l.b16 %v1471
        %v2199 = vunpack.c.l.b16 %v1472
        %v2200 = vunpack.c.l.b16 %v1473
        %v2201 = vunpack.c.l.b16 %v1474
        %v2202 = vunpack.c.l.b16 %v1475
        %v2203 = vunpack.c.l.b16 %v1476
        %v2204 = vunpack.c.l.b16 %v1477
        %v2205 = vunpack.c.l.b16 %v1478
        %v2206 = vunpack.c.l.b16 %v1479
        %v2207 = vunpack.c.l.b16 %v1480
        %v2208 = vunpack.c.l.b16 %v1481
        %v2209 = vunpack.c.l.b16 %v1482
        %v2210 = vunpack.c.l.b16 %v1483
        %v2211 = vunpack.c.l.b16 %v1484
        %v2212 = vunpack.c.l.b16 %v1485
        %v2213 = vunpack.c.l.b16 %v1486
        %v2214 = vunpack.c.l.b16 %v1487
        %v2215 = vunpack.c.l.b16 %v1488
        %v2216 = vunpack.c.l.b16 %v1489
        %v2217 = vunpack.c.l.b16 %v1490
        %v2218 = vunpack.c.l.b16 %v1491
        %v2219 = vunpack.c.l.b16 %v1492
        %v2220 = vunpack.c.l.b16 %v1493
        %v2221 = vunpack.c.l.b16 %v1494
        %v2222 = vunpack.c.l.b16 %v1495
        %v2223 = vunpack.c.l.b16 %v1496
        %v2224 = vunpack.c.l.b16 %v1497
        %v2225 = vunpack.c.l.b16 %v1498
        %v2226 = vunpack.c.l.b16 %v1499
        %v2227 = vunpack.c.l.b16 %v1500
        %v2228 = vunpack.c.l.b16 %v1501
        %v2229 = vunpack.c.l.b16 %v1502
        %v2230 = vunpack.c.l.b16 %v1503
        %v2231 = vunpack.c.l.b16 %v1504
        %v2232 = vunpack.c.l.b16 %v1505
        %v2233 = vunpack.c.l.b16 %v1506
        %v2234 = vunpack.c.l.b16 %v1507
        %v2235 = vunpack.c.l.b16 %v1508
        %v2236 = vunpack.c.l.b16 %v1509
        %v2237 = vunpack.c.l.b16 %v1510
        %v2238 = vunpack.c.l.b16 %v1511
        %v2239 = vunpack.c.l.b16 %v1512
        %v2240 = vunpack.c.l.b16 %v1513
        %v2241 = vunpack.c.l.b16 %v1514
        %v2242 = vunpack.c.l.b16 %v1515
        %v2243 = vunpack.c.l.b16 %v1516
        %v2244 = vunpack.c.l.b16 %v1517
        %v2245 = vunpack.c.l.b16 %v1518
        %v2246 = vunpack.c.l.b16 %v1519
        %v2247 = vunpack.c.l.b16 %v1520
        %v2248 = vunpack.c.l.b16 %v1521
        %v2249 = vunpack.c.l.b16 %v1522
        %v2250 = vunpack.c.l.b16 %v1523
        %v2251 = vunpack.c.l.b16 %v1524
        %v2252 = vpack.c.b16 %v2109, %v2108
        %v2253 = vpack.c.b16 %v2111, %v2110
        %v2254 = vpack.c.b16 %v2113, %v2112
        %v2255 = vpack.c.b16 %v2115, %v2114
        %v2256 = vpack.c.b16 %v2117, %v2116
        %v2257 = vpack.c.b16 %v2119, %v2118
        %v2258 = vpack.c.b16 %v2121, %v2120
        %v2259 = vpack.c.b16 %v2123, %v2122
        %v2260 = vpack.c.b16 %v2125, %v2124
        %v2261 = vpack.c.b16 %v2127, %v2126
        %v2262 = vpack.c.b16 %v2129, %v2128
        %v2263 = vpack.c.b16 %v2131, %v2130
        %v2264 = vpack.c.b16 %v2133, %v2132
        %v2265 = vpack.c.b16 %v2135, %v2134
        %v2266 = vpack.c.b16 %v2137, %v2136
        %v2267 = vpack.c.b16 %v2139, %v2138
        %v2268 = vpack.c.b16 %v2141, %v2140
        %v2269 = vpack.c.b16 %v2143, %v2142
        %v2270 = vpack.c.b16 %v2145, %v2144
        %v2271 = vpack.c.b16 %v2147, %v2146
        %v2272 = vpack.c.b16 %v2149, %v2148
        %v2273 = vpack.c.b16 %v2151, %v2150
        %v2274 = vpack.c.b16 %v2153, %v2152
        %v2275 = vpack.c.b16 %v2155, %v2154
        %v2276 = vpack.c.b16 %v2157, %v2156
        %v2277 = vpack.c.b16 %v2159, %v2158
        %v2278 = vpack.c.b16 %v2161, %v2160
        %v2279 = vpack.c.b16 %v2163, %v2162
        %v2280 = vpack.c.b16 %v2165, %v2164
        %v2281 = vpack.c.b16 %v2167, %v2166
        %v2282 = vpack.c.b16 %v2169, %v2168
        %v2283 = vpack.c.b16 %v2171, %v2170
        %v2284 = vpack.c.b16 %v2173, %v2172
        %v2285 = vpack.c.b16 %v2175, %v2174
        %v2286 = vpack.c.b16 %v2177, %v2176
        %v2287 = vpack.c.b16 %v2179, %v2178
        %v2288 = vpack.c.b16 %v2181, %v2180
        %v2289 = vpack.c.b16 %v2183, %v2182
        %v2290 = vpack.c.b16 %v2185, %v2184
        %v2291 = vpack.c.b16 %v2187, %v2186
        %v2292 = vpack.c.b16 %v2189, %v2188
        %v2293 = vpack.c.b16 %v2191, %v2190
        %v2294 = vpack.c.b16 %v2193, %v2192
        %v2295 = vpack.c.b16 %v2195, %v2194
        %v2296 = vpack.c.b16 %v2197, %v2196
        %v2297 = vpack.c.b16 %v2199, %v2198
        %v2298 = vpack.c.b16 %v2201, %v2200
        %v2299 = vpack.c.b16 %v2203, %v2202
        %v2300 = vpack.c.b16 %v2205, %v2204
        %v2301 = vpack.c.b16 %v2207, %v2206
        %v2302 = vpack.c.b16 %v2209, %v2208
        %v2303 = vpack.c.b16 %v2211, %v2210
        %v2304 = vpack.c.b16 %v2213, %v2212
        %v2305 = vpack.c.b16 %v2215, %v2214
        %v2306 = vpack.c.b16 %v2217, %v2216
        %v2307 = vpack.c.b16 %v2219, %v2218
        %v2308 = vpack.c.b16 %v2221, %v2220
        %v2309 = vpack.c.b16 %v2223, %v2222
        %v2310 = vpack.c.b16 %v2225, %v2224
        %v2311 = vpack.c.b16 %v2227, %v2226
        %v2312 = vpack.c.b16 %v2229, %v2228
        %v2313 = vpack.c.b16 %v2231, %v2230
        %v2314 = vpack.c.b16 %v2233, %v2232
        %v2315 = vpack.c.b16 %v2235, %v2234
        %v2316 = vpack.c.b16 %v2237, %v2236
        %v2317 = vpack.c.b16 %v2239, %v2238
        %v2318 = vpack.c.b16 %v2241, %v2240
        %v2319 = vpack.c.b16 %v2243, %v2242
        %v2320 = vpack.c.b16 %v2245, %v2244
        %v2321 = vpack.c.b16 %v2247, %v2246
        %v2322 = vpack.c.b16 %v2249, %v2248
        %v2323 = vpack.c.b16 %v2251, %v2250
        %2396 = vmatprep.subr.bf16.mxu0 0
        %2397 = vmatpush1.bf16.msra.mxu0 %v2252
        %2398 = vmatprep.subr.bf16.mxu0 0
        %2399 = vmatpush1.bf16.msra.mxu0 %v2253
        %2400 = vmatprep.subr.bf16.mxu0 0
        %2401 = vmatpush1.bf16.msra.mxu0 %v2254
        %2402 = vmatprep.subr.bf16.mxu0 0
        %2403 = vmatpush1.bf16.msra.mxu0 %v2255
        %2404 = vmatprep.subr.bf16.mxu0 0
        %2405 = vmatpush1.bf16.msra.mxu0 %v2256
        %2406 = vmatprep.subr.bf16.mxu0 0
        %2407 = vmatpush1.bf16.msra.mxu0 %v2257
        %2408 = vmatprep.subr.bf16.mxu0 0
        %2409 = vmatpush1.bf16.msra.mxu0 %v2258
        %2410 = vmatprep.subr.bf16.mxu0 0
        %2411 = vmatpush1.bf16.msra.mxu0 %v2259
        %2412 = vmatprep.subr.bf16.mxu0 0
        %2413 = vmatpush1.bf16.msra.mxu0 %v2260
        %2414 = vmatprep.subr.bf16.mxu0 0
        %2415 = vmatpush1.bf16.msra.mxu0 %v2261
        %2416 = vmatprep.subr.bf16.mxu0 0
        %2417 = vmatpush1.bf16.msra.mxu0 %v2262
        %2418 = vmatprep.subr.bf16.mxu0 0
        %2419 = vmatpush1.bf16.msra.mxu0 %v2263
        %2420 = vmatprep.subr.bf16.mxu0 0
        %2421 = vmatpush1.bf16.msra.mxu0 %v2264
        %2422 = vmatprep.subr.bf16.mxu0 0
        %2423 = vmatpush1.bf16.msra.mxu0 %v2265
        %2424 = vmatprep.subr.bf16.mxu0 0
        %2425 = vmatpush1.bf16.msra.mxu0 %v2266
        %2426 = vmatprep.subr.bf16.mxu0 0
        %2427 = vmatpush1.bf16.msra.mxu0 %v2267
        %2428 = vmatprep.mubr.bf16.mxu0 %v1565
        %2429 = vmatmul.mubr.bf16.gmra.mrb[0].mxu0 %v1548
        %v2430 = vpop.f32.mrb[0].mxu0
        %v2431 = vadd.f32 %v1530, %v2430
        %v2432 = vpop.f32.mrb[0].mxu0
        %v2433 = vpop.f32.mrb[0].mxu0
        %v2434 = vadd.f32 %v1530, %v2433
        %v2435 = vpop.f32.mrb[0].mxu0
        %2436 = vmatprep.mubr.bf16.mxu0 %v1702
        %2437 = vmatmul.mubr.bf16.gmra.mrb[0].mxu0 %v1693
        %v2438 = vpop.f32.mrb[0].mxu0
        %v2439 = vadd.f32 %v1530, %v2438
        %v2440 = vpop.f32.mrb[0].mxu0
        %v2441 = vpop.f32.mrb[0].mxu0
        %v2442 = vadd.f32 %v1530, %v2441
        %v2443 = vpop.f32.mrb[0].mxu0
        %2444 = vmatprep.mubr.bf16.mxu0 %v1783
        %2445 = vmatmul.mubr.bf16.gmra.mrb[0].mxu0 %v1774
        %v2446 = vpop.f32.mrb[0].mxu0
        %v2447 = vadd.f32 %v1530, %v2446
        %v2448 = vpop.f32.mrb[0].mxu0
        %v2449 = vpop.f32.mrb[0].mxu0
        %v2450 = vadd.f32 %v1530, %v2449
        %v2451 = vpop.f32.mrb[0].mxu0
        %2452 = vmatprep.mubr.bf16.mxu0 %v1864
        %2453 = vmatmul.mubr.bf16.gmra.mrb[0].mxu0 %v1855
        %v2454 = vpop.f32.mrb[0].mxu0
        %v2455 = vadd.f32 %v1530, %v2454
        %v2456 = vpop.f32.mrb[0].mxu0
        %v2457 = vpop.f32.mrb[0].mxu0
        %v2458 = vadd.f32 %v1530, %v2457
        %v2459 = vpop.f32.mrb[0].mxu0
        %2460 = vdwg.mxu0
        %2461 = vmatprep.subr.bf16.mxu0 0
        %2462 = vmatpush1.bf16.msra.mxu0 %v2268
        %2463 = vmatprep.subr.bf16.mxu0 0
        %2464 = vmatpush1.bf16.msra.mxu0 %v2269
        %2465 = vmatprep.subr.bf16.mxu0 0
        %2466 = vmatpush1.bf16.msra.mxu0 %v2270
        %2467 = vmatprep.subr.bf16.mxu0 0
        %2468 = vmatpush1.bf16.msra.mxu0 %v2271
        %2469 = vmatprep.subr.bf16.mxu0 0
        %2470 = vmatpush1.bf16.msra.mxu0 %v2272
        %2471 = vmatprep.subr.bf16.mxu0 0
        %2472 = vmatpush1.bf16.msra.mxu0 %v2273
        %2473 = vmatprep.subr.bf16.mxu0 0
        %2474 = vmatpush1.bf16.msra.mxu0 %v2274
        %2475 = vmatprep.subr.bf16.mxu0 0
        %2476 = vmatpush1.bf16.msra.mxu0 %v2275
        %2477 = vmatprep.subr.bf16.mxu0 0
        %2478 = vmatpush1.bf16.msra.mxu0 %v2276
        %2479 = vmatprep.subr.bf16.mxu0 0
        %2480 = vmatpush1.bf16.msra.mxu0 %v2277
        %2481 = vmatprep.subr.bf16.mxu0 0
        %2482 = vmatpush1.bf16.msra.mxu0 %v2278
        %2483 = vmatprep.subr.bf16.mxu0 0
        %2484 = vmatpush1.bf16.msra.mxu0 %v2279
        %2485 = vmatprep.subr.bf16.mxu0 0
        %2486 = vmatpush1.bf16.msra.mxu0 %v2280
        %2487 = vmatprep.subr.bf16.mxu0 0
        %2488 = vmatpush1.bf16.msra.mxu0 %v2281
        %2489 = vmatprep.subr.bf16.mxu0 0
        %2490 = vmatpush1.bf16.msra.mxu0 %v2282
        %2491 = vmatprep.subr.bf16.mxu0 0
        %2492 = vmatpush1.bf16.msra.mxu0 %v2283
        %2493 = vmatprep.mubr.bf16.mxu0 %v1599
        %2494 = vmatmul.mubr.bf16.gmra.mrb[0].mxu0 %v1582
        %v2495 = vpop.f32.mrb[0].mxu0
        %v2496 = vadd.f32 %v2431, %v2495
        %v2497 = vpop.f32.mrb[0].mxu0
        %v2498 = vpop.f32.mrb[0].mxu0
        %v2499 = vadd.f32 %v2434, %v2498
        %v2500 = vpop.f32.mrb[0].mxu0
        %2501 = vmatprep.mubr.bf16.mxu0 %v1720
        %2502 = vmatmul.mubr.bf16.gmra.mrb[0].mxu0 %v1711
        %v2503 = vpop.f32.mrb[0].mxu0
        %v2504 = vadd.f32 %v2439, %v2503
        %v2505 = vpop.f32.mrb[0].mxu0
        %v2506 = vpop.f32.mrb[0].mxu0
        %v2507 = vadd.f32 %v2442, %v2506
        %v2508 = vpop.f32.mrb[0].mxu0
        %2509 = vmatprep.mubr.bf16.mxu0 %v1801
        %2510 = vmatmul.mubr.bf16.gmra.mrb[0].mxu0 %v1792
        %v2511 = vpop.f32.mrb[0].mxu0
        %v2512 = vadd.f32 %v2447, %v2511
        %v2513 = vpop.f32.mrb[0].mxu0
        %v2514 = vpop.f32.mrb[0].mxu0
        %v2515 = vadd.f32 %v2450, %v2514
        %v2516 = vpop.f32.mrb[0].mxu0
        %2517 = vmatprep.mubr.bf16.mxu0 %v1882
        %2518 = vmatmul.mubr.bf16.gmra.mrb[0].mxu0 %v1873
        %v2519 = vpop.f32.mrb[0].mxu0
        %v2520 = vadd.f32 %v2455, %v2519
        %v2521 = vpop.f32.mrb[0].mxu0
        %v2522 = vpop.f32.mrb[0].mxu0
        %v2523 = vadd.f32 %v2458, %v2522
        %v2524 = vpop.f32.mrb[0].mxu0
        %2525 = vdwg.mxu0
        %2526 = vmatprep.subr.bf16.mxu0 0
        %2527 = vmatpush1.bf16.msra.mxu0 %v2284
        %2528 = vmatprep.subr.bf16.mxu0 0
        %2529 = vmatpush1.bf16.msra.mxu0 %v2285
        %2530 = vmatprep.subr.bf16.mxu0 0
        %2531 = vmatpush1.bf16.msra.mxu0 %v2286
        %2532 = vmatprep.subr.bf16.mxu0 0
        %2533 = vmatpush1.bf16.msra.mxu0 %v2287
        %2534 = vmatprep.subr.bf16.mxu0 0
        %2535 = vmatpush1.bf16.msra.mxu0 %v2288
        %2536 = vmatprep.subr.bf16.mxu0 0
        %2537 = vmatpush1.bf16.msra.mxu0 %v2289
        %2538 = vmatprep.subr.bf16.mxu0 0
        %2539 = vmatpush1.bf16.msra.mxu0 %v2290
        %2540 = vmatprep.subr.bf16.mxu0 0
        %2541 = vmatpush1.bf16.msra.mxu0 %v2291
        %2542 = vmatprep.subr.bf16.mxu0 0
        %2543 = vmatpush1.bf16.msra.mxu0 %v2292
        %2544 = vmatprep.subr.bf16.mxu0 0
        %2545 = vmatpush1.bf16.msra.mxu0 %v2293
        %2546 = vmatprep.subr.bf16.mxu0 0
        %2547 = vmatpush1.bf16.msra.mxu0 %v2294
        %2548 = vmatprep.subr.bf16.mxu0 0
        %2549 = vmatpush1.bf16.msra.mxu0 %v2295
        %2550 = vmatprep.subr.bf16.mxu0 0
        %2551 = vmatpush1.bf16.msra.mxu0 %v2296
        %2552 = vmatprep.subr.bf16.mxu0 0
        %2553 = vmatpush1.bf16.msra.mxu0 %v2297
        %2554 = vmatprep.subr.bf16.mxu0 0
        %2555 = vmatpush1.bf16.msra.mxu0 %v2298
        %2556 = vmatprep.subr.bf16.mxu0 0
        %2557 = vmatpush1.bf16.msra.mxu0 %v2299
        %2558 = vmatprep.mubr.bf16.mxu0 %v1633
        %2559 = vmatmul.mubr.bf16.gmra.mrb[0].mxu0 %v1616
        %v2560 = vpop.f32.mrb[0].mxu0
        %v2561 = vadd.f32 %v2496, %v2560
        %v2562 = vpop.f32.mrb[0].mxu0
        %v2563 = vpop.f32.mrb[0].mxu0
        %v2564 = vadd.f32 %v2499, %v2563
        %v2565 = vpop.f32.mrb[0].mxu0
        %2566 = vmatprep.mubr.bf16.mxu0 %v1738
        %2567 = vmatmul.mubr.bf16.gmra.mrb[0].mxu0 %v1729
        %v2568 = vpop.f32.mrb[0].mxu0
        %v2569 = vadd.f32 %v2504, %v2568
        %v2570 = vpop.f32.mrb[0].mxu0
        %v2571 = vpop.f32.mrb[0].mxu0
        %v2572 = vadd.f32 %v2507, %v2571
        %v2573 = vpop.f32.mrb[0].mxu0
        %2574 = vmatprep.mubr.bf16.mxu0 %v1819
        %2575 = vmatmul.mubr.bf16.gmra.mrb[0].mxu0 %v1810
        %v2576 = vpop.f32.mrb[0].mxu0
        %v2577 = vadd.f32 %v2512, %v2576
        %v2578 = vpop.f32.mrb[0].mxu0
        %v2579 = vpop.f32.mrb[0].mxu0
        %v2580 = vadd.f32 %v2515, %v2579
        %v2581 = vpop.f32.mrb[0].mxu0
        %2582 = vmatprep.mubr.bf16.mxu0 %v1900
        %2583 = vmatmul.mubr.bf16.gmra.mrb[0].mxu0 %v1891
        %v2584 = vpop.f32.mrb[0].mxu0
        %v2585 = vadd.f32 %v2520, %v2584
        %v2586 = vpop.f32.mrb[0].mxu0
        %v2587 = vpop.f32.mrb[0].mxu0
        %v2588 = vadd.f32 %v2523, %v2587
        %v2589 = vpop.f32.mrb[0].mxu0
        %2590 = vdwg.mxu0
        %2591 = vmatprep.subr.bf16.mxu0 0
        %2592 = vmatpush1.bf16.msra.mxu0 %v2300
        %2593 = vmatprep.subr.bf16.mxu0 0
        %2594 = vmatpush1.bf16.msra.mxu0 %v2301
        %2595 = vmatprep.subr.bf16.mxu0 0
        %2596 = vmatpush1.bf16.msra.mxu0 %v2302
        %2597 = vmatprep.subr.bf16.mxu0 0
        %2598 = vmatpush1.bf16.msra.mxu0 %v2303
        %2599 = vmatprep.subr.bf16.mxu0 0
        %2600 = vmatpush1.bf16.msra.mxu0 %v2304
        %2601 = vmatprep.subr.bf16.mxu0 0
        %2602 = vmatpush1.bf16.msra.mxu0 %v2305
        %2603 = vmatprep.subr.bf16.mxu0 0
        %2604 = vmatpush1.bf16.msra.mxu0 %v2306
        %2605 = vmatprep.subr.bf16.mxu0 0
        %2606 = vmatpush1.bf16.msra.mxu0 %v2307
        %2607 = vmatprep.subr.bf16.mxu0 0
        %2608 = vmatpush1.bf16.msra.mxu0 %v2308
        %2609 = vmatprep.subr.bf16.mxu0 0
        %2610 = vmatpush1.bf16.msra.mxu0 %v2309
        %2611 = vmatprep.subr.bf16.mxu0 0
        %2612 = vmatpush1.bf16.msra.mxu0 %v2310
        %2613 = vmatprep.subr.bf16.mxu0 0
        %2614 = vmatpush1.bf16.msra.mxu0 %v2311
        %2615 = vmatprep.subr.bf16.mxu0 0
        %2616 = vmatpush1.bf16.msra.mxu0 %v2312
        %2617 = vmatprep.subr.bf16.mxu0 0
        %2618 = vmatpush1.bf16.msra.mxu0 %v2313
        %2619 = vmatprep.subr.bf16.mxu0 0
        %2620 = vmatpush1.bf16.msra.mxu0 %v2314
        %2621 = vmatprep.subr.bf16.mxu0 0
        %2622 = vmatpush1.bf16.msra.mxu0 %v2315
        %2623 = vmatprep.mubr.bf16.mxu0 %v1667
        %2624 = vmatmul.mubr.bf16.gmra.mrb[0].mxu0 %v1650
        %v2625 = vpop.f32.mrb[0].mxu0
        %v2626 = vadd.f32 %v2561, %v2625
        %v2627 = vpop.f32.mrb[0].mxu0
        %v2628 = vpop.f32.mrb[0].mxu0
        %v2629 = vadd.f32 %v2564, %v2628
        %v2630 = vpop.f32.mrb[0].mxu0
        %2631 = vmatprep.mubr.bf16.mxu0 %v1756
        %2632 = vmatmul.mubr.bf16.gmra.mrb[0].mxu0 %v1747
        %v2633 = vpop.f32.mrb[0].mxu0
        %v2634 = vadd.f32 %v2569, %v2633
        %v2635 = vpop.f32.mrb[0].mxu0
        %v2636 = vpop.f32.mrb[0].mxu0
        %v2637 = vadd.f32 %v2572, %v2636
        %v2638 = vpop.f32.mrb[0].mxu0
        %2639 = vmatprep.mubr.bf16.mxu0 %v1837
        %2640 = vmatmul.mubr.bf16.gmra.mrb[0].mxu0 %v1828
        %v2641 = vpop.f32.mrb[0].mxu0
        %v2642 = vadd.f32 %v2577, %v2641
        %v2643 = vpop.f32.mrb[0].mxu0
        %v2644 = vpop.f32.mrb[0].mxu0
        %v2645 = vadd.f32 %v2580, %v2644
        %v2646 = vpop.f32.mrb[0].mxu0
        %2647 = vmatprep.mubr.bf16.mxu0 %v1918
        %2648 = vmatmul.mubr.bf16.gmra.mrb[0].mxu0 %v1909
        %v2649 = vpop.f32.mrb[0].mxu0
        %v2650 = vadd.f32 %v2585, %v2649
        %v2651 = vpop.f32.mrb[0].mxu0
        %v2652 = vpop.f32.mrb[0].mxu0
        %v2653 = vadd.f32 %v2588, %v2652
        %v2654 = vpop.f32.mrb[0].mxu0
        %2655 = vdwg.mxu0
        %2656 = vmatprep.subr.bf16.mxu0 0
        %2657 = vmatpush1.bf16.msra.mxu0 %v2316
        %2658 = vmatprep.subr.bf16.mxu0 0
        %2659 = vmatpush1.bf16.msra.mxu0 %v2317
        %2660 = vmatprep.subr.bf16.mxu0 0
        %2661 = vmatpush1.bf16.msra.mxu0 %v2318
        %2662 = vmatprep.subr.bf16.mxu0 0
        %2663 = vmatpush1.bf16.msra.mxu0 %v2319
        %2664 = vmatprep.subr.bf16.mxu0 0
        %2665 = vmatpush1.bf16.msra.mxu0 %v2320
        %2666 = vmatprep.subr.bf16.mxu0 0
        %2667 = vmatpush1.bf16.msra.mxu0 %v2321
        %2668 = vmatprep.subr.bf16.mxu0 0
        %2669 = vmatpush1.bf16.msra.mxu0 %v2322
        %2670 = vmatprep.subr.bf16.mxu0 0
        %2671 = vmatpush1.bf16.msra.mxu0 %v2323
        %2672 = vmatprep.subr.bf16.mxu0 0
        %2673 = vmatpush1.bf16.msra.mxu0 0
        %2674 = vmatprep.subr.bf16.mxu0 0
        %2675 = vmatpush1.bf16.msra.mxu0 0
        %2676 = vmatprep.subr.bf16.mxu0 0
        %2677 = vmatpush1.bf16.msra.mxu0 0
        %2678 = vmatprep.subr.bf16.mxu0 0
        %2679 = vmatpush1.bf16.msra.mxu0 0
        %2680 = vmatprep.subr.bf16.mxu0 0
        %2681 = vmatpush1.bf16.msra.mxu0 0
        %2682 = vmatprep.subr.bf16.mxu0 0
        %2683 = vmatpush1.bf16.msra.mxu0 0
        %2684 = vmatprep.subr.bf16.mxu0 0
        %2685 = vmatpush1.bf16.msra.mxu0 0
        %2686 = vmatprep.subr.bf16.mxu0 0
        %2687 = vmatpush1.bf16.msra.mxu0 0
        %2688 = vmatprep.mubr.bf16.mxu0 0
        %2689 = vmatmul.mubr.bf16.gmra.mrb[0].mxu0 %v1684
        %v2690 = vpop.f32.mrb[0].mxu0
        %v2691 = vadd.f32 %v2626, %v2690
        %v2692 = vpop.f32.mrb[0].mxu0
        %v2693 = vpop.f32.mrb[0].mxu0
        %v2694 = vadd.f32 %v2629, %v2693
        %v2695 = vpop.f32.mrb[0].mxu0
        %2696 = vmatprep.mubr.bf16.mxu0 0
        %2697 = vmatmul.mubr.bf16.gmra.mrb[0].mxu0 %v1765
        %v2698 = vpop.f32.mrb[0].mxu0
        %v2699 = vadd.f32 %v2634, %v2698
        %v2700 = vpop.f32.mrb[0].mxu0
        %v2701 = vpop.f32.mrb[0].mxu0
        %v2702 = vadd.f32 %v2637, %v2701
        %v2703 = vpop.f32.mrb[0].mxu0
        %2704 = vmatprep.mubr.bf16.mxu0 0
        %2705 = vmatmul.mubr.bf16.gmra.mrb[0].mxu0 %v1846
        %v2706 = vpop.f32.mrb[0].mxu0
        %v2707 = vadd.f32 %v2642, %v2706
        %v2708 = vpop.f32.mrb[0].mxu0
        %v2709 = vpop.f32.mrb[0].mxu0
        %v2710 = vadd.f32 %v2645, %v2709
        %v2711 = vpop.f32.mrb[0].mxu0
        %2712 = vmatprep.mubr.bf16.mxu0 0
        %2713 = vmatmul.mubr.bf16.gmra.mrb[0].mxu0 %v1927
        %v2714 = vpop.f32.mrb[0].mxu0
        %v2715 = vadd.f32 %v2650, %v2714
        %v2716 = vpop.f32.mrb[0].mxu0
        %v2717 = vpop.f32.mrb[0].mxu0
        %v2718 = vadd.f32 %v2653, %v2717
        %v2719 = vpop.f32.mrb[0].mxu0
        %2720 = vdwg.mxu0
        %v2721 = vmax.f32 %v2691, 0.0
        %v2722 = vmax.f32 %v2694, 0.0
        %v2723 = vmax.f32 %v2699, 0.0
        %v2724 = vmax.f32 %v2702, 0.0
        %v2725 = vmax.f32 %v2707, 0.0
        %v2726 = vmax.f32 %v2710, 0.0
        %v2727 = vmax.f32 %v2715, 0.0
        %v2728 = vmax.f32 %v2718, 0.0
        %v2729 = vpack.c.bf16 %v2722, %v2721
        %v2730 = vpack.c.bf16 %v2724, %v2723
        %v2731 = vpack.c.bf16 %v2726, %v2725
        %v2732 = vpack.c.bf16 %v2728, %v2727
        %v2733 = vld [vmem:[#allocation9] sm:$0xff]
        %v2734 = vld [vmem:[#allocation9 + $0x8] sm:$0xff]
        %v2735 = vld [vmem:[#allocation9 + $0x10] sm:$0xff]
        %v2736 = vld [vmem:[#allocation9 + $0x18] sm:$0xff]
        %v2737 = vld [vmem:[#allocation9 + $0x20] sm:$0xff]
        %v2738 = vld [vmem:[#allocation9 + $0x28] sm:$0xff]
        %v2739 = vld [vmem:[#allocation9 + $0x30] sm:$0xff]
        %v2740 = vld [vmem:[#allocation9 + $0x38] sm:$0xff]
        %v2741 = vld [vmem:[#allocation9 + $0x40] sm:$0xff]
        %v2742 = vld [vmem:[#allocation9 + $0x48] sm:$0xff]
        %v2743 = vld [vmem:[#allocation9 + $0x50] sm:$0xff]
        %v2744 = vld [vmem:[#allocation9 + $0x58] sm:$0xff]
        %v2745 = vld [vmem:[#allocation9 + $0x60] sm:$0xff]
        %v2746 = vld [vmem:[#allocation9 + $0x68] sm:$0xff]
        %v2747 = vld [vmem:[#allocation9 + $0x70] sm:$0xff]
        %v2748 = vld [vmem:[#allocation9 + $0x78] sm:$0xff]
        %v2749 = vld [vmem:[#allocation9 + $0x80] sm:$0xff]
        %v2750 = vld [vmem:[#allocation9 + $0x88] sm:$0xff]
        %v2751 = vld [vmem:[#allocation9 + $0x90] sm:$0xff]
        %v2752 = vld [vmem:[#allocation9 + $0x98] sm:$0xff]
        %v2753 = vld [vmem:[#allocation9 + $0xa0] sm:$0xff]
        %v2754 = vld [vmem:[#allocation9 + $0xa8] sm:$0xff]
        %v2755 = vld [vmem:[#allocation9 + $0xb0] sm:$0xff]
        %v2756 = vld [vmem:[#allocation9 + $0xb8] sm:$0xff]
        %v2757 = vld [vmem:[#allocation9 + $0xc0] sm:$0xff]
        %v2758 = vld [vmem:[#allocation9 + $0xc8] sm:$0xff]
        %v2759 = vld [vmem:[#allocation9 + $0xd0] sm:$0xff]
        %v2760 = vld [vmem:[#allocation9 + $0xd8] sm:$0xff]
        %v2761 = vld [vmem:[#allocation9 + $0xe0] sm:$0xff]
        %v2762 = vld [vmem:[#allocation9 + $0xe8] sm:$0xff]
        %v2763 = vld [vmem:[#allocation9 + $0xf0] sm:$0xff]
        %v2764 = vld [vmem:[#allocation9 + $0xf8] sm:$0xff]
        %v2765 = vld [vmem:[%s6] sm:$0xf]
        %v2767 = vlaneseq
        %v2768 = vshrl.u32 %v2767, 7
        %v2769 = vsub.s32 0, %v2768
        %v2770 = vrot.slane %v2765, %v2769
        %v2771 = vlaneseq
        %v2772 = vshrl.u32 %v2771, 7
        %v2773 = vsub.s32 1, %v2772
        %v2774 = vrot.slane %v2765, %v2773
        %v2775 = vlaneseq
        %v2776 = vshrl.u32 %v2775, 7
        %v2777 = vsub.s32 2, %v2776
        %v2778 = vrot.slane %v2765, %v2777
        %v2779 = vlaneseq
        %v2780 = vshrl.u32 %v2779, 7
        %v2781 = vsub.s32 3, %v2780
        %v2782 = vrot.slane %v2765, %v2781
        %v2819 = vunpack.c.l.b16 %v2733
        %v2820 = vunpack.c.h.b16 %v2733
        %v2821 = vunpack.c.l.b16 %v2734
        %v2822 = vunpack.c.h.b16 %v2734
        %v2823 = vunpack.c.l.b16 %v2735
        %v2824 = vunpack.c.h.b16 %v2735
        %v2825 = vunpack.c.l.b16 %v2736
        %v2826 = vunpack.c.h.b16 %v2736
        %v2827 = vunpack.c.l.b16 %v2737
        %v2828 = vunpack.c.h.b16 %v2737
        %v2829 = vunpack.c.l.b16 %v2738
        %v2830 = vunpack.c.h.b16 %v2738
        %v2831 = vunpack.c.l.b16 %v2739
        %v2832 = vunpack.c.h.b16 %v2739
        %v2833 = vunpack.c.l.b16 %v2740
        %v2834 = vunpack.c.h.b16 %v2740
        %v2835 = vunpack.c.l.b16 %v2741
        %v2836 = vunpack.c.h.b16 %v2741
        %v2837 = vunpack.c.l.b16 %v2742
        %v2838 = vunpack.c.h.b16 %v2742
        %v2839 = vunpack.c.l.b16 %v2743
        %v2840 = vunpack.c.h.b16 %v2743
        %v2841 = vunpack.c.l.b16 %v2744
        %v2842 = vunpack.c.h.b16 %v2744
        %v2843 = vunpack.c.l.b16 %v2745
        %v2844 = vunpack.c.h.b16 %v2745
        %v2845 = vunpack.c.l.b16 %v2746
        %v2846 = vunpack.c.h.b16 %v2746
        %v2847 = vunpack.c.l.b16 %v2747
        %v2848 = vunpack.c.h.b16 %v2747
        %v2849 = vunpack.c.l.b16 %v2748
        %v2850 = vunpack.c.h.b16 %v2748
        %v2851 = vunpack.c.l.b16 %v2749
        %v2852 = vunpack.c.h.b16 %v2749
        %v2853 = vunpack.c.l.b16 %v2750
        %v2854 = vunpack.c.h.b16 %v2750
        %v2855 = vunpack.c.l.b16 %v2751
        %v2856 = vunpack.c.h.b16 %v2751
        %v2857 = vunpack.c.l.b16 %v2752
        %v2858 = vunpack.c.h.b16 %v2752
        %v2859 = vunpack.c.l.b16 %v2753
        %v2860 = vunpack.c.h.b16 %v2753
        %v2861 = vunpack.c.l.b16 %v2754
        %v2862 = vunpack.c.h.b16 %v2754
        %v2863 = vunpack.c.l.b16 %v2755
        %v2864 = vunpack.c.h.b16 %v2755
        %v2865 = vunpack.c.l.b16 %v2756
        %v2866 = vunpack.c.h.b16 %v2756
        %v2867 = vunpack.c.l.b16 %v2757
        %v2868 = vunpack.c.h.b16 %v2757
        %v2869 = vunpack.c.l.b16 %v2758
        %v2870 = vunpack.c.h.b16 %v2758
        %v2871 = vunpack.c.l.b16 %v2759
        %v2872 = vunpack.c.h.b16 %v2759
        %v2873 = vunpack.c.l.b16 %v2760
        %v2874 = vunpack.c.h.b16 %v2760
        %v2875 = vunpack.c.l.b16 %v2761
        %v2876 = vunpack.c.h.b16 %v2761
        %v2877 = vunpack.c.l.b16 %v2762
        %v2878 = vunpack.c.h.b16 %v2762
        %v2879 = vunpack.c.l.b16 %v2763
        %v2880 = vunpack.c.h.b16 %v2763
        %v2881 = vunpack.c.l.b16 %v2764
        %v2882 = vunpack.c.h.b16 %v2764
        %v2883 = vpack.c.b16 %v2823, %v2819
        %v2884 = vpack.c.b16 %v2824, %v2820
        %v2885 = vpack.c.b16 %v2825, %v2821
        %v2886 = vpack.c.b16 %v2826, %v2822
        %v2887 = vpack.c.b16 %v2831, %v2827
        %v2888 = vpack.c.b16 %v2832, %v2828
        %v2889 = vpack.c.b16 %v2833, %v2829
        %v2890 = vpack.c.b16 %v2834, %v2830
        %v2891 = vpack.c.b16 %v2839, %v2835
        %v2892 = vpack.c.b16 %v2840, %v2836
        %v2893 = vpack.c.b16 %v2841, %v2837
        %v2894 = vpack.c.b16 %v2842, %v2838
        %v2895 = vpack.c.b16 %v2847, %v2843
        %v2896 = vpack.c.b16 %v2848, %v2844
        %v2897 = vpack.c.b16 %v2849, %v2845
        %v2898 = vpack.c.b16 %v2850, %v2846
        %v2899 = vpack.c.b16 %v2855, %v2851
        %v2900 = vpack.c.b16 %v2856, %v2852
        %v2901 = vpack.c.b16 %v2857, %v2853
        %v2902 = vpack.c.b16 %v2858, %v2854
        %v2903 = vpack.c.b16 %v2863, %v2859
        %v2904 = vpack.c.b16 %v2864, %v2860
        %v2905 = vpack.c.b16 %v2865, %v2861
        %v2906 = vpack.c.b16 %v2866, %v2862
        %v2907 = vpack.c.b16 %v2871, %v2867
        %v2908 = vpack.c.b16 %v2872, %v2868
        %v2909 = vpack.c.b16 %v2873, %v2869
        %v2910 = vpack.c.b16 %v2874, %v2870
        %v2911 = vpack.c.b16 %v2879, %v2875
        %v2912 = vpack.c.b16 %v2880, %v2876
        %v2913 = vpack.c.b16 %v2881, %v2877
        %v2914 = vpack.c.b16 %v2882, %v2878
        %2947 = vmatprep.subr.bf16.mxu0 %v2884
        %2948 = vmatpush1.bf16.msra.mxu0 %v2883
        %2949 = vmatprep.subr.bf16.mxu0 %v2888
        %2950 = vmatpush1.bf16.msra.mxu0 %v2887
        %2951 = vmatprep.subr.bf16.mxu0 %v2892
        %2952 = vmatpush1.bf16.msra.mxu0 %v2891
        %2953 = vmatprep.subr.bf16.mxu0 %v2896
        %2954 = vmatpush1.bf16.msra.mxu0 %v2895
        %2955 = vmatprep.subr.bf16.mxu0 %v2900
        %2956 = vmatpush1.bf16.msra.mxu0 %v2899
        %2957 = vmatprep.subr.bf16.mxu0 %v2904
        %2958 = vmatpush1.bf16.msra.mxu0 %v2903
        %2959 = vmatprep.subr.bf16.mxu0 %v2908
        %2960 = vmatpush1.bf16.msra.mxu0 %v2907
        %2961 = vmatprep.subr.bf16.mxu0 %v2912
        %2962 = vmatpush1.bf16.msra.mxu0 %v2911
        %2963 = vmatprep.subr.bf16.mxu0 0
        %2964 = vmatpush1.bf16.msra.mxu0 0
        %2965 = vmatprep.subr.bf16.mxu0 0
        %2966 = vmatpush1.bf16.msra.mxu0 0
        %2967 = vmatprep.subr.bf16.mxu0 0
        %2968 = vmatpush1.bf16.msra.mxu0 0
        %2969 = vmatprep.subr.bf16.mxu0 0
        %2970 = vmatpush1.bf16.msra.mxu0 0
        %2971 = vmatprep.subr.bf16.mxu0 0
        %2972 = vmatpush1.bf16.msra.mxu0 0
        %2973 = vmatprep.subr.bf16.mxu0 0
        %2974 = vmatpush1.bf16.msra.mxu0 0
        %2975 = vmatprep.subr.bf16.mxu0 0
        %2976 = vmatpush1.bf16.msra.mxu0 0
        %2977 = vmatprep.subr.bf16.mxu0 0
        %2978 = vmatpush1.bf16.msra.mxu0 0
        %2979 = vmatprep.mubr.bf16.mxu0 0
        %2980 = vmatmul.mubr.bf16.gmra.mrb[0].mxu0 %v2729
        %v2981 = vpop.f32.mrb[0].mxu0
        %v2982 = vadd.f32 %v2770, %v2981
        %v2983 = vpop.f32.mrb[0].mxu0
        %v2984 = vadd.f32 %v2774, %v2983
        %v2985 = vpop.f32.mrb[0].mxu0
        %v2986 = vadd.f32 %v2770, %v2985
        %v2987 = vpop.f32.mrb[0].mxu0
        %v2988 = vadd.f32 %v2774, %v2987
        %2989 = vmatprep.mubr.bf16.mxu0 0
        %2990 = vmatmul.mubr.bf16.gmra.mrb[0].mxu0 %v2730
        %v2991 = vpop.f32.mrb[0].mxu0
        %v2992 = vadd.f32 %v2770, %v2991
        %v2993 = vpop.f32.mrb[0].mxu0
        %v2994 = vadd.f32 %v2774, %v2993
        %v2995 = vpop.f32.mrb[0].mxu0
        %v2996 = vadd.f32 %v2770, %v2995
        %v2997 = vpop.f32.mrb[0].mxu0
        %v2998 = vadd.f32 %v2774, %v2997
        %2999 = vmatprep.mubr.bf16.mxu0 0
        %3000 = vmatmul.mubr.bf16.gmra.mrb[0].mxu0 %v2731
        %v3001 = vpop.f32.mrb[0].mxu0
        %v3002 = vadd.f32 %v2770, %v3001
        %v3003 = vpop.f32.mrb[0].mxu0
        %v3004 = vadd.f32 %v2774, %v3003
        %v3005 = vpop.f32.mrb[0].mxu0
        %v3006 = vadd.f32 %v2770, %v3005
        %v3007 = vpop.f32.mrb[0].mxu0
        %v3008 = vadd.f32 %v2774, %v3007
        %3009 = vmatprep.mubr.bf16.mxu0 0
        %3010 = vmatmul.mubr.bf16.gmra.mrb[0].mxu0 %v2732
        %v3011 = vpop.f32.mrb[0].mxu0
        %v3012 = vadd.f32 %v2770, %v3011
        %v3013 = vpop.f32.mrb[0].mxu0
        %v3014 = vadd.f32 %v2774, %v3013
        %v3015 = vpop.f32.mrb[0].mxu0
        %v3016 = vadd.f32 %v2770, %v3015
        %v3017 = vpop.f32.mrb[0].mxu0
        %v3018 = vadd.f32 %v2774, %v3017
        %3019 = vdwg.mxu0
        %3020 = vmatprep.subr.bf16.mxu0 %v2886
        %3021 = vmatpush1.bf16.msra.mxu0 %v2885
        %3022 = vmatprep.subr.bf16.mxu0 %v2890
        %3023 = vmatpush1.bf16.msra.mxu0 %v2889
        %3024 = vmatprep.subr.bf16.mxu0 %v2894
        %3025 = vmatpush1.bf16.msra.mxu0 %v2893
        %3026 = vmatprep.subr.bf16.mxu0 %v2898
        %3027 = vmatpush1.bf16.msra.mxu0 %v2897
        %3028 = vmatprep.subr.bf16.mxu0 %v2902
        %3029 = vmatpush1.bf16.msra.mxu0 %v2901
        %3030 = vmatprep.subr.bf16.mxu0 %v2906
        %3031 = vmatpush1.bf16.msra.mxu0 %v2905
        %3032 = vmatprep.subr.bf16.mxu0 %v2910
        %3033 = vmatpush1.bf16.msra.mxu0 %v2909
        %3034 = vmatprep.subr.bf16.mxu0 %v2914
        %3035 = vmatpush1.bf16.msra.mxu0 %v2913
        %3036 = vmatprep.subr.bf16.mxu0 0
        %3037 = vmatpush1.bf16.msra.mxu0 0
        %3038 = vmatprep.subr.bf16.mxu0 0
        %3039 = vmatpush1.bf16.msra.mxu0 0
        %3040 = vmatprep.subr.bf16.mxu0 0
        %3041 = vmatpush1.bf16.msra.mxu0 0
        %3042 = vmatprep.subr.bf16.mxu0 0
        %3043 = vmatpush1.bf16.msra.mxu0 0
        %3044 = vmatprep.subr.bf16.mxu0 0
        %3045 = vmatpush1.bf16.msra.mxu0 0
        %3046 = vmatprep.subr.bf16.mxu0 0
        %3047 = vmatpush1.bf16.msra.mxu0 0
        %3048 = vmatprep.subr.bf16.mxu0 0
        %3049 = vmatpush1.bf16.msra.mxu0 0
        %3050 = vmatprep.subr.bf16.mxu0 0
        %3051 = vmatpush1.bf16.msra.mxu0 0
        %3052 = vmatprep.mubr.bf16.mxu0 0
        %3053 = vmatmul.mubr.bf16.gmra.mrb[0].mxu0 %v2729
        %v3054 = vpop.f32.mrb[0].mxu0
        %v3055 = vadd.f32 %v2778, %v3054
        %v3056 = vpop.f32.mrb[0].mxu0
        %v3057 = vadd.f32 %v2782, %v3056
        %v3058 = vpop.f32.mrb[0].mxu0
        %v3059 = vadd.f32 %v2778, %v3058
        %v3060 = vpop.f32.mrb[0].mxu0
        %v3061 = vadd.f32 %v2782, %v3060
        %3062 = vmatprep.mubr.bf16.mxu0 0
        %3063 = vmatmul.mubr.bf16.gmra.mrb[0].mxu0 %v2730
        %v3064 = vpop.f32.mrb[0].mxu0
        %v3065 = vadd.f32 %v2778, %v3064
        %v3066 = vpop.f32.mrb[0].mxu0
        %v3067 = vadd.f32 %v2782, %v3066
        %v3068 = vpop.f32.mrb[0].mxu0
        %v3069 = vadd.f32 %v2778, %v3068
        %v3070 = vpop.f32.mrb[0].mxu0
        %v3071 = vadd.f32 %v2782, %v3070
        %3072 = vmatprep.mubr.bf16.mxu0 0
        %3073 = vmatmul.mubr.bf16.gmra.mrb[0].mxu0 %v2731
        %v3074 = vpop.f32.mrb[0].mxu0
        %v3075 = vadd.f32 %v2778, %v3074
        %v3076 = vpop.f32.mrb[0].mxu0
        %v3077 = vadd.f32 %v2782, %v3076
        %v3078 = vpop.f32.mrb[0].mxu0
        %v3079 = vadd.f32 %v2778, %v3078
        %v3080 = vpop.f32.mrb[0].mxu0
        %v3081 = vadd.f32 %v2782, %v3080
        %3082 = vmatprep.mubr.bf16.mxu0 0
        %3083 = vmatmul.mubr.bf16.gmra.mrb[0].mxu0 %v2732
        %v3084 = vpop.f32.mrb[0].mxu0
        %v3085 = vadd.f32 %v2778, %v3084
        %v3086 = vpop.f32.mrb[0].mxu0
        %v3087 = vadd.f32 %v2782, %v3086
        %v3088 = vpop.f32.mrb[0].mxu0
        %v3089 = vadd.f32 %v2778, %v3088
        %v3090 = vpop.f32.mrb[0].mxu0
        %v3091 = vadd.f32 %v2782, %v3090
        %3092 = vdwg.mxu0
        %v3093 = vunpack.c.l.bf16 %v344
        %v3094 = vunpack.c.h.bf16 %v344
        %v3095 = vunpack.c.l.bf16 %v345
        %v3096 = vunpack.c.h.bf16 %v345
        %v3097 = vunpack.c.l.bf16 %v346
        %v3098 = vunpack.c.h.bf16 %v346
        %v3099 = vunpack.c.l.bf16 %v347
        %v3100 = vunpack.c.h.bf16 %v347
        %v3101 = vunpack.c.l.bf16 %v348
        %v3102 = vunpack.c.h.bf16 %v348
        %v3103 = vunpack.c.l.bf16 %v349
        %v3104 = vunpack.c.h.bf16 %v349
        %v3105 = vunpack.c.l.bf16 %v350
        %v3106 = vunpack.c.h.bf16 %v350
        %v3107 = vunpack.c.l.bf16 %v351
        %v3108 = vunpack.c.h.bf16 %v351
        %v3109 = vunpack.c.l.bf16 %v352
        %v3110 = vunpack.c.h.bf16 %v352
        %v3111 = vunpack.c.l.bf16 %v353
        %v3112 = vunpack.c.h.bf16 %v353
        %v3113 = vunpack.c.l.bf16 %v354
        %v3114 = vunpack.c.h.bf16 %v354
        %v3115 = vunpack.c.l.bf16 %v355
        %v3116 = vunpack.c.h.bf16 %v355
        %v3117 = vunpack.c.l.bf16 %v356
        %v3118 = vunpack.c.h.bf16 %v356
        %v3119 = vunpack.c.l.bf16 %v357
        %v3120 = vunpack.c.h.bf16 %v357
        %v3121 = vunpack.c.l.bf16 %v358
        %v3122 = vunpack.c.h.bf16 %v358
        %v3123 = vunpack.c.l.bf16 %v359
        %v3124 = vunpack.c.h.bf16 %v359
        %v3125 = vadd.f32 %v2982, %v3093
        %v3126 = vadd.f32 %v2984, %v3094
        %v3127 = vadd.f32 %v3055, %v3095
        %v3128 = vadd.f32 %v3057, %v3096
        %v3129 = vadd.f32 %v2986, %v3097
        %v3130 = vadd.f32 %v2988, %v3098
        %v3131 = vadd.f32 %v3059, %v3099
        %v3132 = vadd.f32 %v3061, %v3100
        %v3133 = vadd.f32 %v2992, %v3101
        %v3134 = vadd.f32 %v2994, %v3102
        %v3135 = vadd.f32 %v3065, %v3103
        %v3136 = vadd.f32 %v3067, %v3104
        %v3137 = vadd.f32 %v2996, %v3105
        %v3138 = vadd.f32 %v2998, %v3106
        %v3139 = vadd.f32 %v3069, %v3107
        %v3140 = vadd.f32 %v3071, %v3108
        %v3141 = vadd.f32 %v3002, %v3109
        %v3142 = vadd.f32 %v3004, %v3110
        %v3143 = vadd.f32 %v3075, %v3111
        %v3144 = vadd.f32 %v3077, %v3112
        %v3145 = vadd.f32 %v3006, %v3113
        %v3146 = vadd.f32 %v3008, %v3114
        %v3147 = vadd.f32 %v3079, %v3115
        %v3148 = vadd.f32 %v3081, %v3116
        %v3149 = vadd.f32 %v3012, %v3117
        %v3150 = vadd.f32 %v3014, %v3118
        %v3151 = vadd.f32 %v3085, %v3119
        %v3152 = vadd.f32 %v3087, %v3120
        %v3153 = vadd.f32 %v3016, %v3121
        %v3154 = vadd.f32 %v3018, %v3122
        %v3155 = vadd.f32 %v3089, %v3123
        %v3156 = vadd.f32 %v3091, %v3124
        %v3157 = vmax.f32 %v3125, 0.0
        %v3158 = vmax.f32 %v3126, 0.0
        %v3159 = vmax.f32 %v3127, 0.0
        %v3160 = vmax.f32 %v3128, 0.0
        %v3161 = vmax.f32 %v3129, 0.0
        %v3162 = vmax.f32 %v3130, 0.0
        %v3163 = vmax.f32 %v3131, 0.0
        %v3164 = vmax.f32 %v3132, 0.0
        %v3165 = vmax.f32 %v3133, 0.0
        %v3166 = vmax.f32 %v3134, 0.0
        %v3167 = vmax.f32 %v3135, 0.0
        %v3168 = vmax.f32 %v3136, 0.0
        %v3169 = vmax.f32 %v3137, 0.0
        %v3170 = vmax.f32 %v3138, 0.0
        %v3171 = vmax.f32 %v3139, 0.0
        %v3172 = vmax.f32 %v3140, 0.0
        %v3173 = vmax.f32 %v3141, 0.0
        %v3174 = vmax.f32 %v3142, 0.0
        %v3175 = vmax.f32 %v3143, 0.0
        %v3176 = vmax.f32 %v3144, 0.0
        %v3177 = vmax.f32 %v3145, 0.0
        %v3178 = vmax.f32 %v3146, 0.0
        %v3179 = vmax.f32 %v3147, 0.0
        %v3180 = vmax.f32 %v3148, 0.0
        %v3181 = vmax.f32 %v3149, 0.0
        %v3182 = vmax.f32 %v3150, 0.0
        %v3183 = vmax.f32 %v3151, 0.0
        %v3184 = vmax.f32 %v3152, 0.0
        %v3185 = vmax.f32 %v3153, 0.0
        %v3186 = vmax.f32 %v3154, 0.0
        %v3187 = vmax.f32 %v3155, 0.0
        %v3188 = vmax.f32 %v3156, 0.0
        %v3189 = vpack.c.bf16 %v3161, %v3157
        %v3190 = vpack.c.bf16 %v3162, %v3158
        %v3191 = vpack.c.bf16 %v3163, %v3159
        %v3192 = vpack.c.bf16 %v3164, %v3160
        %v3193 = vpack.c.bf16 %v3169, %v3165
        %v3194 = vpack.c.bf16 %v3170, %v3166
        %v3195 = vpack.c.bf16 %v3171, %v3167
        %v3196 = vpack.c.bf16 %v3172, %v3168
        %v3197 = vpack.c.bf16 %v3177, %v3173
        %v3198 = vpack.c.bf16 %v3178, %v3174
        %v3199 = vpack.c.bf16 %v3179, %v3175
        %v3200 = vpack.c.bf16 %v3180, %v3176
        %v3201 = vpack.c.bf16 %v3185, %v3181
        %v3202 = vpack.c.bf16 %v3186, %v3182
        %v3203 = vpack.c.bf16 %v3187, %v3183
        %v3204 = vpack.c.bf16 %v3188, %v3184
        %v3221 = vunpack.c.l.b16 %v3189
        %v3222 = vunpack.c.l.b16 %v3190
        %v3223 = vunpack.c.l.b16 %v3191
        %v3224 = vunpack.c.l.b16 %v3192
        %v3225 = vunpack.c.h.b16 %v3189
        %v3226 = vunpack.c.h.b16 %v3190
        %v3227 = vunpack.c.h.b16 %v3191
        %v3228 = vunpack.c.h.b16 %v3192
        %v3229 = vunpack.c.l.b16 %v3193
        %v3230 = vunpack.c.l.b16 %v3194
        %v3231 = vunpack.c.l.b16 %v3195
        %v3232 = vunpack.c.l.b16 %v3196
        %v3233 = vunpack.c.h.b16 %v3193
        %v3234 = vunpack.c.h.b16 %v3194
        %v3235 = vunpack.c.h.b16 %v3195
        %v3236 = vunpack.c.h.b16 %v3196
        %v3237 = vunpack.c.l.b16 %v3197
        %v3238 = vunpack.c.l.b16 %v3198
        %v3239 = vunpack.c.l.b16 %v3199
        %v3240 = vunpack.c.l.b16 %v3200
        %v3241 = vunpack.c.h.b16 %v3197
        %v3242 = vunpack.c.h.b16 %v3198
        %v3243 = vunpack.c.h.b16 %v3199
        %v3244 = vunpack.c.h.b16 %v3200
        %v3245 = vunpack.c.l.b16 %v3201
        %v3246 = vunpack.c.l.b16 %v3202
        %v3247 = vunpack.c.l.b16 %v3203
        %v3248 = vunpack.c.l.b16 %v3204
        %v3249 = vunpack.c.h.b16 %v3201
        %v3250 = vunpack.c.h.b16 %v3202
        %v3251 = vunpack.c.h.b16 %v3203
        %v3252 = vunpack.c.h.b16 %v3204
        %v3253 = vpack.c.b16 %v3222, %v3221
        %v3254 = vpack.c.b16 %v3224, %v3223
        %v3255 = vpack.c.b16 %v3226, %v3225
        %v3256 = vpack.c.b16 %v3228, %v3227
        %v3257 = vpack.c.b16 %v3230, %v3229
        %v3258 = vpack.c.b16 %v3232, %v3231
        %v3259 = vpack.c.b16 %v3234, %v3233
        %v3260 = vpack.c.b16 %v3236, %v3235
        %v3261 = vpack.c.b16 %v3238, %v3237
        %v3262 = vpack.c.b16 %v3240, %v3239
        %v3263 = vpack.c.b16 %v3242, %v3241
        %v3264 = vpack.c.b16 %v3244, %v3243
        %v3265 = vpack.c.b16 %v3246, %v3245
        %v3266 = vpack.c.b16 %v3248, %v3247
        %v3267 = vpack.c.b16 %v3250, %v3249
        %v3268 = vpack.c.b16 %v3252, %v3251
        %3285 = vst [vmem:[%s340] sm:$0xff] %v3253
        %3286 = vst [vmem:[%s340 + $0x8] sm:$0xff] %v3254
        %3287 = vst [vmem:[%s340 + $0x10] sm:$0xff] %v3255
        %3288 = vst [vmem:[%s340 + $0x18] sm:$0xff] %v3256
        %3289 = vst [vmem:[%s340 + $0x20] sm:$0xff] %v3257
        %3290 = vst [vmem:[%s340 + $0x28] sm:$0xff] %v3258
        %3291 = vst [vmem:[%s340 + $0x30] sm:$0xff] %v3259
        %3292 = vst [vmem:[%s340 + $0x38] sm:$0xff] %v3260
        %3293 = vst [vmem:[%s340 + $0x40] sm:$0xff] %v3261
        %3294 = vst [vmem:[%s340 + $0x48] sm:$0xff] %v3262
        %3295 = vst [vmem:[%s340 + $0x50] sm:$0xff] %v3263
        %3296 = vst [vmem:[%s340 + $0x58] sm:$0xff] %v3264
        %3297 = vst [vmem:[%s340 + $0x60] sm:$0xff] %v3265
        %3298 = vst [vmem:[%s340 + $0x68] sm:$0xff] %v3266
        %3299 = vst [vmem:[%s340 + $0x70] sm:$0xff] %v3267
        %3300 = vst [vmem:[%s340 + $0x78] sm:$0xff] %v3268
        %s3301 = sand.u32 %s186, 1
        %s3302 = scalar_lea.sflag [#allocation5], %s3301
        %s3303 = sand.u32 %s186, 1
        %s3304 = smul.addr %s3303, 128
        %s3305 = scalar_lea.vmem [#allocation11], %s3304
        // Predicated region
        $region65: #{tpu_custom_call.1} parent=47 // pred_check
          %p3306 = pneg %p196
        $region66: #{tpu_custom_call.1} parent=47 // pred_check_branch
          %3308 = sbr.rel (%p3306) target = $region68
        $region67: #{tpu_custom_call.1} parent=47 // pred_region
          %s3310 = ssub.s32 2048, 2048
          %3311 = vsyncadd %s3302, %s3310
          %s3312 = smul.addr %s26, 32
          %s3313 = smul.addr %s3312, 64
          %s3314 = scalar_lea.hbm %s7, %s3313
          %s3315 = sshll.u32 %s3305, 4
          %s3316 = int_to_ptr.vmem [resolvable:$true] %s3315
          %3321 = dma.vmem_to_hbm [thread:$0]  %s3316, 2048, %s3314, %s3302, 256, 256, 16
        $region68: #{tpu_custom_call.1} parent=47 // pred_fallthru
          _
      $region48: #{tpu_custom_call.1} parent=5 // pred_fallthru
        _
      %p3322 = scmp.le.s32.totalorder 2, %s21
      // Predicated region
      $region69: #{tpu_custom_call.1} parent=5 // pred_check
        %p3323 = pneg %p3322
      $region70: #{tpu_custom_call.1} parent=5 // pred_check_branch
        %3325 = sbr.rel (%p3323) target = $region72
      $region71: #{tpu_custom_call.1} parent=5 // pred_region
        %s3326 = ssub.s32 %s21, 2
        // Predicated region
        $region73: #{tpu_custom_call.1} parent=71 // pred_check
          %p3327 = pneg %p202
        $region74: #{tpu_custom_call.1} parent=71 // pred_check_branch
          %3329 = sbr.rel (%p3327) target = $region76
        $region75: #{tpu_custom_call.1} parent=71 // pred_region
          %s3330 = sand.u32 %s187, 1
          %s3331 = scalar_lea.sflag [#allocation5], %s3330
          %s3332 = sand.u32 %s187, 1
          %s3333 = smul.addr %s3332, 128
          %s3334 = scalar_lea.vmem [#allocation11], %s3333
          %3335 = dma.done %s3331, 2048
        $region76: #{tpu_custom_call.1} parent=71 // pred_fallthru
          _
      $region72: #{tpu_custom_call.1} parent=5 // pred_fallthru
        _
    $region6: #{tpu_custom_call.1} parent=1 // loop_footer
      %s25 = sadd.s32 1, %s21
    $region7: #{tpu_custom_call.1} parent=1 // loop_footer_branch
      %20 = sbr.rel target = $region3
    $region8: #{tpu_custom_call.1} parent=1 // loop_exit
      _
    %3336 = vsyncpa [#allocation4], 1
    %s3337 = scalar_lea.sflag [#allocation4], 1
    %3338 = vsyncpa %s3337, 1
    %3339 = vsyncpa [#allocation7], 1
    %3340 = vsyncpa [#allocation10], 1
    %3341 = vsyncpa [#allocation5], 1
    %s3342 = scalar_lea.sflag [#allocation5], 1
    %3343 = vsyncpa %s3342, 1

</llo_original>
